<compile_context>
chip_gen: v5e
topology: v5e:2x2
jax: 0.10.0
libtpu: 0.0.40
codegen_flags: <defaults>
</compile_context>

<pallas_src>
import functools

import jax
import jax.numpy as jnp
from jax.experimental import pallas as pl
from jax.experimental.pallas import tpu as pltpu

_LANE = 128
_SUBLANE = 8


# ----------------------------------------------------------------------------
# small helpers
# ----------------------------------------------------------------------------

def _ceil_to(x, m):
    return ((x + m - 1) // m) * m


def _row_tiling(m, max_tile):
    """Round rows up to a sublane multiple and pick a row tile <= max_tile."""
    mp = _ceil_to(m, _SUBLANE)
    tm = min(max_tile, mp)
    mp = _ceil_to(mp, tm)
    return mp, tm


def _pad_rows(x2, mp):
    m = x2.shape[0]
    if mp == m:
        return x2
    return jnp.pad(x2, ((0, mp - m), (0, 0)))


def _hidden_tiling(eh):
    """(padded hidden dim, hidden tile) for the FFN contraction axis."""
    if eh <= 512:
        return eh, eh
    for cand in (512, 384, 256, 128):
        if eh % cand == 0:
            return eh, cand
    return _ceil_to(eh, 512), 512


def _col_tile(np_):
    if np_ <= 512:
        return np_
    for cand in (512, 384, 256, 128):
        if np_ % cand == 0:
            return cand
    return np_


def _k_tile(k):
    if k <= 512:
        return k
    if k % 512 == 0:
        return 512
    return k


@functools.lru_cache(maxsize=None)
def _vmem_limit_bytes():
    """Per-generation scoped-VMEM limit (raise on v5e/v6e, cap on v7x)."""
    try:
        kind = jax.devices()[0].device_kind.lower()
    except Exception:
        return None
    if "v7" in kind or "tpu7" in kind:
        return 48 * 1024 * 1024       # 64 MiB physical per TC -> stay conservative
    if "v5" in kind or "v6" in kind:
        return 96 * 1024 * 1024       # 128 MiB physical -> raise the default cap
    return None


def _cparams(dims):
    vl = _vmem_limit_bytes()
    if vl is None:
        return pltpu.CompilerParams(dimension_semantics=dims)
    return pltpu.CompilerParams(dimension_semantics=dims, vmem_limit_bytes=vl)


# ----------------------------------------------------------------------------
# Pallas kernels
# ----------------------------------------------------------------------------

def _linear_kernel(x_ref, w_ref, b_ref, o_ref):
    """Tiled y = x @ w + b accumulating directly into the resident f32 output block."""
    @pl.when(pl.program_id(2) == 0)
    def _():
        o_ref[...] = jnp.broadcast_to(b_ref[...], o_ref.shape).astype(o_ref.dtype)

    o_ref[...] += jnp.dot(x_ref[...], w_ref[...],
                          preferred_element_type=jnp.float32)


def _ffn_ln_kernel(x_ref, w1_ref, b1_ref, w2_ref, b2_ref, g_ref, bln_ref,
                   o_ref, acc_ref):
    """LayerNorm( relu(x @ w1 + b1) @ w2 + b2 + x ), hidden (4E) axis tiled on the grid."""
    hidx = pl.program_id(1)

    @pl.when(hidx == 0)
    def _():
        acc_ref[...] = jnp.zeros_like(acc_ref)

    x = x_ref[...]                                                    # (tm, E) bf16
    h = jnp.dot(x, w1_ref[...], preferred_element_type=jnp.float32) + b1_ref[...]
    h = jnp.maximum(h, 0.0).astype(jnp.bfloat16)
    acc_ref[...] += jnp.dot(h, w2_ref[...], preferred_element_type=jnp.float32)

    @pl.when(hidx == pl.num_programs(1) - 1)
    def _():
        # residual + LayerNorm epilogue (torch LN: biased var, eps=1e-5)
        y = acc_ref[...] + b2_ref[...] + x_ref[...].astype(jnp.float32)
        mean = jnp.mean(y, axis=-1, keepdims=True)
        c = y - mean
        var = jnp.mean(c * c, axis=-1, keepdims=True)
        inv = jax.lax.rsqrt(var + 1e-5)
        o_ref[...] = (c * inv * g_ref[...] + bln_ref[...]).astype(o_ref.dtype)


def _mha_ln_kernel(kvv_ref, xq_ref, xkv_ref, wq_ref, wkv_ref, wo_ref, bo_ref,
                   g_ref, b_ref, o_ref, *, heads, hd, scale, causal):
    """Fused multi-head attention + residual + LayerNorm for one batch element.

    xq_ref:  (1, qlen, E) bf16     xkv_ref: (1, klen, E) bf16
    wq_ref:  (hd, hd)  bf16        wkv_ref: (hd, 2*hd) bf16  (shared across heads)
    wo_ref:  (E, E)    bf16        bo_ref:  (1, E) f32
    g_ref/b_ref: (1, E) f32 LayerNorm params; kvv_ref: (1, 1, klen) key-validity.
    o_ref:   (1, qlen, E) bf16 = LayerNorm(attention_out + x_q).
    """
    xq = xq_ref[0]                        # (qlen, E) bf16
    xkv = xkv_ref[0]                      # (klen, E) bf16
    q_len, emb = xq.shape
    k_len = xkv.shape[0]

    # mask built in-kernel (VPU compares) instead of a materialized HBM mask
    valid = kvv_ref[0] != 0.0             # (1, klen) -> broadcasts over query rows
    if causal:
        row = jax.lax.broadcasted_iota(jnp.int32, (q_len, k_len), 0)
        col = jax.lax.broadcasted_iota(jnp.int32, (q_len, k_len), 1)
        allowed = (row >= col) & valid
    else:
        allowed = jnp.broadcast_to(valid, (q_len, k_len))

    neg = jnp.float32(-1e20)
    acc = jnp.broadcast_to(bo_ref[...], (q_len, emb))     # f32, starts at fc_out bias

    # TODO(synk): for long sequences / many heads turn this static loop into a
    # (heads, klen-tile) grid axis with a flash-style online-softmax accumulator.
    for h in range(heads):
        hs = h * hd
        xq_h = xq[:, hs:hs + hd]                                   # (qlen, hd) bf16
        xkv_h = xkv[:, hs:hs + hd]                                 # (klen, hd) bf16

        q = jnp.dot(xq_h, wq_ref[...],
                    preferred_element_type=jnp.float32).astype(jnp.bfloat16)
        kv = jnp.dot(xkv_h, wkv_ref[...],
                     preferred_element_type=jnp.float32)           # (klen, 2*hd) f32
        k = kv[:, :hd].astype(jnp.bfloat16)
        v = kv[:, hd:].astype(jnp.bfloat16)

        # scores contract over head_dim (no explicit transpose needed)
        energy = jax.lax.dot_general(q, k, (((1,), (1,)), ((), ())),
                                     preferred_element_type=jnp.float32)
        # torch order: masked_fill(mask == 0, -1e20) then softmax(energy / sqrt(E))
        energy = jnp.where(allowed, energy, neg) * scale
        energy = energy - jnp.max(energy, axis=-1, keepdims=True)
        p = jnp.exp(energy)
        attn = p / jnp.sum(p, axis=-1, keepdims=True)              # exact division

        ctx = jnp.dot(attn.astype(jnp.bfloat16), v,
                      preferred_element_type=jnp.float32)          # (qlen, hd)
        # fused output projection: concat(heads) @ Wo == sum_h ctx_h @ Wo[h*hd:(h+1)*hd]
        acc = acc + jnp.dot(ctx.astype(jnp.bfloat16), wo_ref[hs:hs + hd, :],
                            preferred_element_type=jnp.float32)

    # fused residual + LayerNorm epilogue
    y = acc + xq.astype(jnp.float32)
    mean = jnp.mean(y, axis=-1, keepdims=True)
    c = y - mean
    var = jnp.mean(c * c, axis=-1, keepdims=True)
    inv = jax.lax.rsqrt(var + 1e-5)
    o_ref[0] = (c * inv * g_ref[...] + b_ref[...]).astype(o_ref.dtype)


# ----------------------------------------------------------------------------
# Pallas wrappers
# ----------------------------------------------------------------------------

def linear(x, w_p, b_p, n_out):
    """y = x @ w + b. w_p: (K, Np) bf16 (lane-pre-padded), b_p: (1, Np) f32. f32 out."""
    orig = x.shape
    K = orig[-1]
    Np = w_p.shape[1]
    x2 = x.reshape(-1, K)
    M = x2.shape[0]
    Mp, tm = _row_tiling(M, 512)
    x2 = _pad_rows(x2, Mp)
    tn = _col_tile(Np)
    tk = _k_tile(K)

    cost = pl.CostEstimate(
        flops=int(2 * Mp * K * Np),
        transcendentals=0,
        bytes_accessed=int(2 * (Mp * K + K * Np) + 4 * (Np + Mp * Np)))

    out = pl.pallas_call(
        _linear_kernel,
        out_shape=jax.ShapeDtypeStruct((Mp, Np), jnp.float32),
        grid=(Mp // tm, Np // tn, K // tk),
        in_specs=[
            pl.BlockSpec((tm, tk), lambda i, j, k: (i, k)),
            pl.BlockSpec((tk, tn), lambda i, j, k: (k, j)),
            pl.BlockSpec((1, tn), lambda i, j, k: (0, j)),
        ],
        out_specs=pl.BlockSpec((tm, tn), lambda i, j, k: (i, j)),
        compiler_params=_cparams(("parallel", "parallel", "arbitrary")),
        cost_estimate=cost,
    )(x2, w_p, b_p)

    return out[:M, :n_out].reshape(orig[:-1] + (n_out,))


def ffn_ln(x, p):
    """LayerNorm(FFN(x) + x) with the hidden (4E) contraction tiled on the grid."""
    orig = x.shape
    E = orig[-1]
    w1, b1, w2, b2 = p["w1"], p["b1"], p["w2"], p["b2"]
    gamma, beta = p["ln2_g"], p["ln2_b"]
    Ehp = w1.shape[1]
    _, th = _hidden_tiling(Ehp)

    x2 = x.reshape(-1, E)
    M = x2.shape[0]
    Mp, tm = _row_tiling(M, 512)
    x2 = _pad_rows(x2, Mp)

    cost = pl.CostEstimate(
        flops=int(4 * Mp * E * Ehp),
        transcendentals=0,
        bytes_accessed=int(2 * (2 * Mp * E + 2 * E * Ehp) + 4 * (Ehp + 3 * E)))

    out = pl.pallas_call(
        _ffn_ln_kernel,
        out_shape=jax.ShapeDtypeStruct((Mp, E), jnp.bfloat16),
        grid=(Mp // tm, Ehp // th),
        in_specs=[
            pl.BlockSpec((tm, E), lambda i, h: (i, 0)),
            pl.BlockSpec((E, th), lambda i, h: (0, h)),
            pl.BlockSpec((1, th), lambda i, h: (0, h)),
            pl.BlockSpec((th, E), lambda i, h: (h, 0)),
            pl.BlockSpec((1, E), lambda i, h: (0, 0)),
            pl.BlockSpec((1, E), lambda i, h: (0, 0)),
            pl.BlockSpec((1, E), lambda i, h: (0, 0)),
        ],
        out_specs=pl.BlockSpec((tm, E), lambda i, h: (i, 0)),
        scratch_shapes=[pltpu.VMEM((tm, E), jnp.float32)],
        compiler_params=_cparams(("parallel", "arbitrary")),
        cost_estimate=cost,
    )(x2, w1, b1, w2, b2, gamma, beta)
    return out[:M].reshape(orig)


def mha_ln(x_q, x_kv, kv_valid3, ap, ln_g, ln_b, heads, causal):
    """Fused MHA + residual + LayerNorm. x_q: (N,qlen,E) bf16, x_kv: (N,klen,E) bf16."""
    N, qlen, E = x_q.shape
    klen = x_kv.shape[1]
    hd = E // heads
    scale = 1.0 / (float(E) ** 0.5)       # reference scales by sqrt(embed_size)

    kern = functools.partial(_mha_ln_kernel, heads=heads, hd=hd,
                             scale=scale, causal=causal)
    cost = pl.CostEstimate(
        flops=int(N * (2 * qlen * hd * E        # Q projections (all heads)
                       + 4 * klen * hd * E      # fused K/V projections
                       + 4 * qlen * klen * E    # scores + context
                       + 2 * qlen * E * E)),    # output projection
        transcendentals=int(N * heads * qlen * klen),
        bytes_accessed=int(2 * N * E * (2 * qlen + klen)
                           + 2 * (3 * hd * hd + E * E)
                           + 4 * (N * klen + 5 * E)))

    return pl.pallas_call(
        kern,
        out_shape=jax.ShapeDtypeStruct((N, qlen, E), jnp.bfloat16),
        grid=(N,),
        in_specs=[
            pl.BlockSpec((1, 1, klen), lambda n: (n, 0, 0)),
            pl.BlockSpec((1, qlen, E), lambda n: (n, 0, 0)),
            pl.BlockSpec((1, klen, E), lambda n: (n, 0, 0)),
            pl.BlockSpec((hd, hd), lambda n: (0, 0)),
            pl.BlockSpec((hd, 2 * hd), lambda n: (0, 0)),
            pl.BlockSpec((E, E), lambda n: (0, 0)),
            pl.BlockSpec((1, E), lambda n: (0, 0)),
            pl.BlockSpec((1, E), lambda n: (0, 0)),
            pl.BlockSpec((1, E), lambda n: (0, 0)),
        ],
        out_specs=pl.BlockSpec((1, qlen, E), lambda n: (n, 0, 0)),
        compiler_params=_cparams(("parallel",)),
        cost_estimate=cost,
    )(kv_valid3, x_q, x_kv, ap["wq"], ap["wkv"], ap["wo"], ap["bo"], ln_g, ln_b)


# ----------------------------------------------------------------------------
# Model forward (glue in plain JAX, hot paths in Pallas)
# ----------------------------------------------------------------------------

def transformer_block_forward(p, x_q, x_kv, kv_valid3, causal, heads):
    x = mha_ln(x_q, x_kv, kv_valid3, p["attn"], p["ln1_g"], p["ln1_b"], heads, causal)
    return ffn_ln(x, p)


def encoder_forward(p, src, src_valid3, heads):
    N, L = src.shape
    # TODO(synk): embedding gather stays in plain JAX (table lookup, not a hot kernel)
    out = p["word_emb"][src] + p["pos_emb"][:L][None, :, :]
    for lp in p["layers"]:
        out = transformer_block_forward(lp, out, out, src_valid3, False, heads)
    return out


def decoder_forward(p, trg, enc_out, src_valid3, heads):
    N, L = trg.shape
    x = p["word_emb"][trg] + p["pos_emb"][:L][None, :, :]
    trg_valid3 = jnp.ones((N, 1, L), jnp.float32)   # reference trg mask is causal-only
    for lp in p["layers"]:
        query = mha_ln(x, x, trg_valid3, lp["attn"], lp["ln_g"], lp["ln_b"],
                       heads, True)
        x = transformer_block_forward(lp["tb"], query, enc_out, src_valid3,
                                      False, heads)
    return linear(x, p["wo"], p["bo"], p["n_out"])


def transformer_forward(params, src, trg, src_pad_idx, heads):
    N, S = src.shape
    src_valid3 = (src != src_pad_idx).astype(jnp.float32).reshape(N, 1, S)
    enc = encoder_forward(params["encoder"], src, src_valid3, heads)
    return decoder_forward(params["decoder"], trg, enc, src_valid3, heads)


# ----------------------------------------------------------------------------
# Deterministic parameter init (reference layout) + one-time kernel prep
# ----------------------------------------------------------------------------

class _Keys:
    def __init__(self, key):
        self._key = key

    def __call__(self):
        self._key, sub = jax.random.split(self._key)
        return sub


def _w(kg, shape, scale=0.02):
    return scale * jax.random.normal(kg(), shape, jnp.float32)


def _init_attention(kg, E, heads):
    hd = E // heads
    return {
        "wv": _w(kg, (hd, hd)), "wk": _w(kg, (hd, hd)), "wq": _w(kg, (hd, hd)),
        "wo": _w(kg, (E, E)), "bo": jnp.zeros((E,), jnp.float32),
    }


def _init_tblock(kg, E, heads, fe):
    return {
        "attn": _init_attention(kg, E, heads),
        "ln1_g": jnp.ones((E,), jnp.float32), "ln1_b": jnp.zeros((E,), jnp.float32),
        "ln2_g": jnp.ones((E,), jnp.float32), "ln2_b": jnp.zeros((E,), jnp.float32),
        "w1": _w(kg, (E, fe * E)), "b1": jnp.zeros((fe * E,), jnp.float32),
        "w2": _w(kg, (fe * E, E)), "b2": jnp.zeros((E,), jnp.float32),
    }


def init_params(key, src_vocab, trg_vocab, E, num_layers, heads, fe, max_len):
    kg = _Keys(key)
    encoder = {
        "word_emb": _w(kg, (src_vocab, E)),
        "pos_emb": _w(kg, (max_len, E)),
        "layers": [_init_tblock(kg, E, heads, fe) for _ in range(num_layers)],
    }
    decoder = {
        "word_emb": _w(kg, (trg_vocab, E)),
        "pos_emb": _w(kg, (max_len, E)),
        "layers": [
            {
                "attn": _init_attention(kg, E, heads),
                "ln_g": jnp.ones((E,), jnp.float32),
                "ln_b": jnp.zeros((E,), jnp.float32),
                "tb": _init_tblock(kg, E, heads, fe),
            }
            for _ in range(num_layers)
        ],
        "wo": _w(kg, (E, trg_vocab)),
        "bo": jnp.zeros((trg_vocab,), jnp.float32),
    }
    return {"encoder": encoder, "decoder": decoder}


def prepare_params(params, E, heads):
    """One-time conversion to kernel layout: bf16 weights, fused K/V, lane pads."""
    def prep_attn(a):
        return {
            "wq": a["wq"].astype(jnp.bfloat16),
            "wkv": jnp.concatenate([a["wk"], a["wv"]], axis=1).astype(jnp.bfloat16),
            "wo": a["wo"].astype(jnp.bfloat16),
            "bo": a["bo"].reshape(1, E).astype(jnp.float32),
        }

    def prep_block(b):
        Eh = b["w1"].shape[1]
        Ehp, _ = _hidden_tiling(Eh)
        return {
            "attn": prep_attn(b["attn"]),
            "ln1_g": b["ln1_g"].reshape(1, E), "ln1_b": b["ln1_b"].reshape(1, E),
            "ln2_g": b["ln2_g"].reshape(1, E), "ln2_b": b["ln2_b"].reshape(1, E),
            "w1": jnp.pad(b["w1"], ((0, 0), (0, Ehp - Eh))).astype(jnp.bfloat16),
            "b1": jnp.pad(b["b1"], (0, Ehp - Eh)).reshape(1, Ehp).astype(jnp.float32),
            "w2": jnp.pad(b["w2"], ((0, Ehp - Eh), (0, 0))).astype(jnp.bfloat16),
            "b2": b["b2"].reshape(1, E).astype(jnp.float32),
        }

    enc, dec = params["encoder"], params["decoder"]
    n_out = dec["wo"].shape[1]
    Np = _ceil_to(max(n_out, _LANE), _LANE)
    enc_p = {
        "word_emb": enc["word_emb"].astype(jnp.bfloat16),
        "pos_emb": enc["pos_emb"].astype(jnp.bfloat16),
        "layers": [prep_block(l) for l in enc["layers"]],
    }
    dec_p = {
        "word_emb": dec["word_emb"].astype(jnp.bfloat16),
        "pos_emb": dec["pos_emb"].astype(jnp.bfloat16),
        "layers": [
            {
                "attn": prep_attn(l["attn"]),
                "ln_g": l["ln_g"].reshape(1, E), "ln_b": l["ln_b"].reshape(1, E),
                "tb": prep_block(l["tb"]),
            }
            for l in dec["layers"]
        ],
        "wo": jnp.pad(dec["wo"], ((0, 0), (0, Np - n_out))).astype(jnp.bfloat16),
        "bo": jnp.pad(dec["bo"], (0, Np - n_out)).reshape(1, Np).astype(jnp.float32),
        "n_out": n_out,
    }
    return {"encoder": enc_p, "decoder": dec_p}


# ----------------------------------------------------------------------------
# Main
# ----------------------------------------------------------------------------

if __name__ == "__main__":
    # small hyper-params consistent with the module's constructor
    SRC_VOCAB, TRG_VOCAB = 50, 60
    SRC_PAD_IDX, TRG_PAD_IDX = 0, 0
    EMBED, HEADS, LAYERS, FE, MAX_LEN = 256, 2, 2, 4, 16   # head_dim=128 (lane aligned)
    N, SRC_LEN, TRG_LEN = 2, 12, 8

    key = jax.random.PRNGKey(0)
    k_param, k_src, k_trg = jax.random.split(key, 3)

    raw = init_params(k_param, SRC_VOCAB, TRG_VOCAB, EMBED, LAYERS, HEADS,
                      FE, MAX_LEN)
    params = prepare_params(raw, EMBED, HEADS)
    src = jax.random.randint(k_src, (N, SRC_LEN), 0, SRC_VOCAB, dtype=jnp.int32)
    trg = jax.random.randint(k_trg, (N, TRG_LEN), 0, TRG_VOCAB, dtype=jnp.int32)

    out = transformer_forward(params, src, trg, SRC_PAD_IDX, HEADS)
    out = jax.block_until_ready(out)

    assert out.shape == (N, TRG_LEN, TRG_VOCAB), out.shape
    assert jnp.all(jnp.isfinite(out))
    print("KERNEL_OK")
</pallas_src>

<mosaic_0001>
module attributes {stable_mosaic.version = 11 : i64} {
  func.func @_mha_ln_kernel(%arg0: i32, %arg1: memref<1x1x12xf32, #tpu.memory_space<vmem>>, %arg2: memref<1x12x256xbf16, #tpu.memory_space<vmem>>, %arg3: memref<1x12x256xbf16, #tpu.memory_space<vmem>>, %arg4: memref<128x128xbf16, #tpu.memory_space<vmem>>, %arg5: memref<128x256xbf16, #tpu.memory_space<vmem>>, %arg6: memref<256x256xbf16, #tpu.memory_space<vmem>>, %arg7: memref<1x256xf32, #tpu.memory_space<vmem>>, %arg8: memref<1x256xf32, #tpu.memory_space<vmem>>, %arg9: memref<1x256xf32, #tpu.memory_space<vmem>>, %arg10: memref<1x12x256xbf16, #tpu.memory_space<vmem>>) attributes {dimension_semantics = [#tpu.dimension_semantics<parallel>], iteration_bounds = array<i64: 2>, scalar_prefetch = 0 : i64, scratch_operands = 0 : i64, tpu.core_type = #tpu.core_type<tc>, window_params = [{transform_indices = @transform_0, window_bounds = array<i64: 1, 1, 12>}, {transform_indices = @transform_1, window_bounds = array<i64: 1, 12, 256>}, {transform_indices = @transform_2, window_bounds = array<i64: 1, 12, 256>}, {pipeline_mode = #tpu.pipeline_mode<synchronous>, transform_indices = @transform_3, window_bounds = array<i64: 128, 128>}, {pipeline_mode = #tpu.pipeline_mode<synchronous>, transform_indices = @transform_4, window_bounds = array<i64: 128, 256>}, {pipeline_mode = #tpu.pipeline_mode<synchronous>, transform_indices = @transform_5, window_bounds = array<i64: 256, 256>}, {pipeline_mode = #tpu.pipeline_mode<synchronous>, transform_indices = @transform_6, window_bounds = array<i64: 1, 256>}, {pipeline_mode = #tpu.pipeline_mode<synchronous>, transform_indices = @transform_7, window_bounds = array<i64: 1, 256>}, {pipeline_mode = #tpu.pipeline_mode<synchronous>, transform_indices = @transform_8, window_bounds = array<i64: 1, 256>}, {transform_indices = @transform_9, window_bounds = array<i64: 1, 12, 256>}]} {
    %c0 = arith.constant 0 : index
    %c0_0 = arith.constant 0 : index
    %c0_1 = arith.constant 0 : index
    %0 = vector.load %arg2[%c0, %c0_0, %c0_1] : memref<1x12x256xbf16, #tpu.memory_space<vmem>>, vector<1x12x256xbf16>
    %1 = vector.shape_cast %0 : vector<1x12x256xbf16> to vector<12x256xbf16>
    %c0_2 = arith.constant 0 : index
    %c0_3 = arith.constant 0 : index
    %c0_4 = arith.constant 0 : index
    %2 = vector.load %arg3[%c0_2, %c0_3, %c0_4] : memref<1x12x256xbf16, #tpu.memory_space<vmem>>, vector<1x12x256xbf16>
    %3 = vector.shape_cast %2 : vector<1x12x256xbf16> to vector<12x256xbf16>
    %c0_5 = arith.constant 0 : index
    %c0_6 = arith.constant 0 : index
    %c0_7 = arith.constant 0 : index
    %4 = vector.load %arg1[%c0_5, %c0_6, %c0_7] : memref<1x1x12xf32, #tpu.memory_space<vmem>>, vector<1x1x12xf32>
    %5 = vector.shape_cast %4 : vector<1x1x12xf32> to vector<1x12xf32>
    %cst = arith.constant 0.000000e+00 : f32
    %6 = vector.broadcast %cst : f32 to vector<1x12xf32>
    %7 = arith.cmpf one, %5, %6 : vector<1x12xf32>
    %8 = vector.shape_cast %7 : vector<1x12xi1> to vector<1x12xi1>
    %9 = vector.broadcast %8 : vector<1x12xi1> to vector<12x12xi1>
    %c0_8 = arith.constant 0 : index
    %c0_9 = arith.constant 0 : index
    %10 = vector.load %arg7[%c0_8, %c0_9] : memref<1x256xf32, #tpu.memory_space<vmem>>, vector<1x256xf32>
    %11 = vector.shape_cast %10 : vector<1x256xf32> to vector<1x256xf32>
    %12 = vector.broadcast %11 : vector<1x256xf32> to vector<12x256xf32>
    %13 = vector.extract_strided_slice %1 {offsets = [0, 0], sizes = [12, 128], strides = [1, 1]} : vector<12x256xbf16> to vector<12x128xbf16>
    %14 = vector.extract_strided_slice %3 {offsets = [0, 0], sizes = [12, 128], strides = [1, 1]} : vector<12x256xbf16> to vector<12x128xbf16>
    %c0_10 = arith.constant 0 : index
    %c0_11 = arith.constant 0 : index
    %15 = vector.load %arg4[%c0_10, %c0_11] : memref<128x128xbf16, #tpu.memory_space<vmem>>, vector<128x128xbf16>
    %cst_12 = arith.constant dense<0.000000e+00> : vector<12x128xf32>
    %16 = tpu.matmul %13, %15, %cst_12 {dimension_numbers = #tpu.dot_dimension_numbers<[1], [0], [0], [1], [0, 0, 1, 1], [], []>} : vector<12x128xbf16>, vector<128x128xbf16>, vector<12x128xf32> -> vector<12x128xf32>
    %17 = arith.truncf %16 : vector<12x128xf32> to vector<12x128xbf16>
    %c0_13 = arith.constant 0 : index
    %c0_14 = arith.constant 0 : index
    %18 = vector.load %arg5[%c0_13, %c0_14] : memref<128x256xbf16, #tpu.memory_space<vmem>>, vector<128x256xbf16>
    %cst_15 = arith.constant dense<0.000000e+00> : vector<12x256xf32>
    %19 = tpu.matmul %14, %18, %cst_15 {dimension_numbers = #tpu.dot_dimension_numbers<[1], [0], [0], [1], [0, 0, 1, 1], [], []>} : vector<12x128xbf16>, vector<128x256xbf16>, vector<12x256xf32> -> vector<12x256xf32>
    %20 = vector.extract_strided_slice %19 {offsets = [0, 0], sizes = [12, 128], strides = [1, 1]} : vector<12x256xf32> to vector<12x128xf32>
    %21 = arith.truncf %20 : vector<12x128xf32> to vector<12x128xbf16>
    %22 = vector.extract_strided_slice %19 {offsets = [0, 128], sizes = [12, 128], strides = [1, 1]} : vector<12x256xf32> to vector<12x128xf32>
    %23 = arith.truncf %22 : vector<12x128xf32> to vector<12x128xbf16>
    %cst_16 = arith.constant dense<0.000000e+00> : vector<12x12xf32>
    %24 = tpu.matmul %17, %21, %cst_16 {dimension_numbers = #tpu.dot_dimension_numbers<[1], [1], [0], [0], [0, 0, 1, 0], [], []>} : vector<12x128xbf16>, vector<12x128xbf16>, vector<12x12xf32> -> vector<12x12xf32>
    %cst_17 = arith.constant -1.000000e+20 : f32
    %25 = vector.broadcast %cst_17 : f32 to vector<12x12xf32>
    %26 = arith.select %9, %24, %25 : vector<12x12xi1>, vector<12x12xf32>
    %cst_18 = arith.constant 6.250000e-02 : f32
    %27 = vector.broadcast %cst_18 : f32 to vector<12x12xf32>
    %28 = arith.mulf %26, %27 : vector<12x12xf32>
    %cst_19 = arith.constant dense<0xFF800000> : vector<12xf32>
    %29 = vector.multi_reduction <maximumf>, %28, %cst_19 [1] : vector<12x12xf32> to vector<12xf32>
    %30 = vector.shape_cast %29 : vector<12xf32> to vector<12x1xf32>
    %31 = vector.broadcast %30 : vector<12x1xf32> to vector<12x12xf32>
    %32 = arith.subf %28, %31 : vector<12x12xf32>
    %33 = math.exp %32 : vector<12x12xf32>
    %cst_20 = arith.constant dense<0.000000e+00> : vector<12xf32>
    %34 = vector.multi_reduction <add>, %33, %cst_20 [1] : vector<12x12xf32> to vector<12xf32>
    %35 = vector.shape_cast %34 : vector<12xf32> to vector<12x1xf32>
    %36 = vector.broadcast %35 : vector<12x1xf32> to vector<12x12xf32>
    %37 = arith.divf %33, %36 : vector<12x12xf32>
    %38 = arith.truncf %37 : vector<12x12xf32> to vector<12x12xbf16>
    %cst_21 = arith.constant dense<0.000000e+00> : vector<12x128xf32>
    %39 = tpu.matmul %38, %23, %cst_21 {dimension_numbers = #tpu.dot_dimension_numbers<[1], [0], [0], [1], [0, 0, 1, 1], [], []>} : vector<12x12xbf16>, vector<12x128xbf16>, vector<12x128xf32> -> vector<12x128xf32>
    %40 = arith.truncf %39 : vector<12x128xf32> to vector<12x128xbf16>
    %c0_22 = arith.constant 0 : index
    %c0_23 = arith.constant 0 : index
    %41 = vector.load %arg6[%c0_22, %c0_23] : memref<256x256xbf16, #tpu.memory_space<vmem>>, vector<128x256xbf16>
    %cst_24 = arith.constant dense<0.000000e+00> : vector<12x256xf32>
    %42 = tpu.matmul %40, %41, %cst_24 {dimension_numbers = #tpu.dot_dimension_numbers<[1], [0], [0], [1], [0, 0, 1, 1], [], []>} : vector<12x128xbf16>, vector<128x256xbf16>, vector<12x256xf32> -> vector<12x256xf32>
    %43 = arith.addf %12, %42 : vector<12x256xf32>
    %44 = vector.extract_strided_slice %1 {offsets = [0, 128], sizes = [12, 128], strides = [1, 1]} : vector<12x256xbf16> to vector<12x128xbf16>
    %45 = vector.extract_strided_slice %3 {offsets = [0, 128], sizes = [12, 128], strides = [1, 1]} : vector<12x256xbf16> to vector<12x128xbf16>
    %c0_25 = arith.constant 0 : index
    %c0_26 = arith.constant 0 : index
    %46 = vector.load %arg4[%c0_25, %c0_26] : memref<128x128xbf16, #tpu.memory_space<vmem>>, vector<128x128xbf16>
    %cst_27 = arith.constant dense<0.000000e+00> : vector<12x128xf32>
    %47 = tpu.matmul %44, %46, %cst_27 {dimension_numbers = #tpu.dot_dimension_numbers<[1], [0], [0], [1], [0, 0, 1, 1], [], []>} : vector<12x128xbf16>, vector<128x128xbf16>, vector<12x128xf32> -> vector<12x128xf32>
    %48 = arith.truncf %47 : vector<12x128xf32> to vector<12x128xbf16>
    %c0_28 = arith.constant 0 : index
    %c0_29 = arith.constant 0 : index
    %49 = vector.load %arg5[%c0_28, %c0_29] : memref<128x256xbf16, #tpu.memory_space<vmem>>, vector<128x256xbf16>
    %cst_30 = arith.constant dense<0.000000e+00> : vector<12x256xf32>
    %50 = tpu.matmul %45, %49, %cst_30 {dimension_numbers = #tpu.dot_dimension_numbers<[1], [0], [0], [1], [0, 0, 1, 1], [], []>} : vector<12x128xbf16>, vector<128x256xbf16>, vector<12x256xf32> -> vector<12x256xf32>
    %51 = vector.extract_strided_slice %50 {offsets = [0, 0], sizes = [12, 128], strides = [1, 1]} : vector<12x256xf32> to vector<12x128xf32>
    %52 = arith.truncf %51 : vector<12x128xf32> to vector<12x128xbf16>
    %53 = vector.extract_strided_slice %50 {offsets = [0, 128], sizes = [12, 128], strides = [1, 1]} : vector<12x256xf32> to vector<12x128xf32>
    %54 = arith.truncf %53 : vector<12x128xf32> to vector<12x128xbf16>
    %cst_31 = arith.constant dense<0.000000e+00> : vector<12x12xf32>
    %55 = tpu.matmul %48, %52, %cst_31 {dimension_numbers = #tpu.dot_dimension_numbers<[1], [1], [0], [0], [0, 0, 1, 0], [], []>} : vector<12x128xbf16>, vector<12x128xbf16>, vector<12x12xf32> -> vector<12x12xf32>
    %cst_32 = arith.constant -1.000000e+20 : f32
    %56 = vector.broadcast %cst_32 : f32 to vector<12x12xf32>
    %57 = arith.select %9, %55, %56 : vector<12x12xi1>, vector<12x12xf32>
    %cst_33 = arith.constant 6.250000e-02 : f32
    %58 = vector.broadcast %cst_33 : f32 to vector<12x12xf32>
    %59 = arith.mulf %57, %58 : vector<12x12xf32>
    %cst_34 = arith.constant dense<0xFF800000> : vector<12xf32>
    %60 = vector.multi_reduction <maximumf>, %59, %cst_34 [1] : vector<12x12xf32> to vector<12xf32>
    %61 = vector.shape_cast %60 : vector<12xf32> to vector<12x1xf32>
    %62 = vector.broadcast %61 : vector<12x1xf32> to vector<12x12xf32>
    %63 = arith.subf %59, %62 : vector<12x12xf32>
    %64 = math.exp %63 : vector<12x12xf32>
    %cst_35 = arith.constant dense<0.000000e+00> : vector<12xf32>
    %65 = vector.multi_reduction <add>, %64, %cst_35 [1] : vector<12x12xf32> to vector<12xf32>
    %66 = vector.shape_cast %65 : vector<12xf32> to vector<12x1xf32>
    %67 = vector.broadcast %66 : vector<12x1xf32> to vector<12x12xf32>
    %68 = arith.divf %64, %67 : vector<12x12xf32>
    %69 = arith.truncf %68 : vector<12x12xf32> to vector<12x12xbf16>
    %cst_36 = arith.constant dense<0.000000e+00> : vector<12x128xf32>
    %70 = tpu.matmul %69, %54, %cst_36 {dimension_numbers = #tpu.dot_dimension_numbers<[1], [0], [0], [1], [0, 0, 1, 1], [], []>} : vector<12x12xbf16>, vector<12x128xbf16>, vector<12x128xf32> -> vector<12x128xf32>
    %71 = arith.truncf %70 : vector<12x128xf32> to vector<12x128xbf16>
    %c128 = arith.constant 128 : index
    %c0_37 = arith.constant 0 : index
    %72 = vector.load %arg6[%c128, %c0_37] : memref<256x256xbf16, #tpu.memory_space<vmem>>, vector<128x256xbf16>
    %cst_38 = arith.constant dense<0.000000e+00> : vector<12x256xf32>
    %73 = tpu.matmul %71, %72, %cst_38 {dimension_numbers = #tpu.dot_dimension_numbers<[1], [0], [0], [1], [0, 0, 1, 1], [], []>} : vector<12x128xbf16>, vector<128x256xbf16>, vector<12x256xf32> -> vector<12x256xf32>
    %74 = arith.addf %43, %73 : vector<12x256xf32>
    %75 = arith.extf %1 : vector<12x256xbf16> to vector<12x256xf32>
    %76 = arith.addf %74, %75 : vector<12x256xf32>
    %cst_39 = arith.constant dense<0.000000e+00> : vector<12xf32>
    %77 = vector.multi_reduction <add>, %76, %cst_39 [1] : vector<12x256xf32> to vector<12xf32>
    %78 = vector.shape_cast %77 : vector<12xf32> to vector<12x1xf32>
    %cst_40 = arith.constant 2.560000e+02 : f32
    %79 = vector.broadcast %cst_40 : f32 to vector<12x1xf32>
    %80 = arith.divf %78, %79 : vector<12x1xf32>
    %81 = vector.broadcast %80 : vector<12x1xf32> to vector<12x256xf32>
    %82 = arith.subf %76, %81 : vector<12x256xf32>
    %83 = arith.mulf %82, %82 : vector<12x256xf32>
    %cst_41 = arith.constant dense<0.000000e+00> : vector<12xf32>
    %84 = vector.multi_reduction <add>, %83, %cst_41 [1] : vector<12x256xf32> to vector<12xf32>
    %85 = vector.shape_cast %84 : vector<12xf32> to vector<12x1xf32>
    %cst_42 = arith.constant 2.560000e+02 : f32
    %86 = vector.broadcast %cst_42 : f32 to vector<12x1xf32>
    %87 = arith.divf %85, %86 : vector<12x1xf32>
    %cst_43 = arith.constant 9.99999974E-6 : f32
    %88 = vector.broadcast %cst_43 : f32 to vector<12x1xf32>
    %89 = arith.addf %87, %88 : vector<12x1xf32>
    %90 = math.rsqrt %89 : vector<12x1xf32>
    %91 = vector.broadcast %90 : vector<12x1xf32> to vector<12x256xf32>
    %92 = arith.mulf %82, %91 : vector<12x256xf32>
    %c0_44 = arith.constant 0 : index
    %c0_45 = arith.constant 0 : index
    %93 = vector.load %arg8[%c0_44, %c0_45] : memref<1x256xf32, #tpu.memory_space<vmem>>, vector<1x256xf32>
    %94 = vector.broadcast %93 : vector<1x256xf32> to vector<12x256xf32>
    %95 = arith.mulf %92, %94 : vector<12x256xf32>
    %c0_46 = arith.constant 0 : index
    %c0_47 = arith.constant 0 : index
    %96 = vector.load %arg9[%c0_46, %c0_47] : memref<1x256xf32, #tpu.memory_space<vmem>>, vector<1x256xf32>
    %97 = vector.broadcast %96 : vector<1x256xf32> to vector<12x256xf32>
    %98 = arith.addf %95, %97 : vector<12x256xf32>
    %99 = arith.truncf %98 : vector<12x256xf32> to vector<12x256xbf16>
    %c0_48 = arith.constant 0 : index
    %c0_49 = arith.constant 0 : index
    %c0_50 = arith.constant 0 : index
    %100 = vector.load %arg10[%c0_48, %c0_49, %c0_50] : memref<1x12x256xbf16, #tpu.memory_space<vmem>>, vector<1x12x256xbf16>
    %101 = vector.shape_cast %100 : vector<1x12x256xbf16> to vector<12x256xbf16>
    %102 = vector.shape_cast %99 : vector<12x256xbf16> to vector<1x12x256xbf16>
    tpu.vector_store %arg10[%c0_48, %c0_49, %c0_50], %102 {strides = array<i32>} : memref<1x12x256xbf16, #tpu.memory_space<vmem>>, vector<1x12x256xbf16>,
    return
  }
  func.func @transform_0(%arg0: i32) -> (i32, i32, i32) {
    %c0_i32 = arith.constant 0 : i32
    %c0_i32_0 = arith.constant 0 : i32
    %c0_i32_1 = arith.constant 0 : i32
    return %arg0, %c0_i32, %c0_i32_0 : i32, i32, i32
  }
  func.func @transform_1(%arg0: i32) -> (i32, i32, i32) {
    %c0_i32 = arith.constant 0 : i32
    %c0_i32_0 = arith.constant 0 : i32
    %c0_i32_1 = arith.constant 0 : i32
    return %arg0, %c0_i32, %c0_i32_0 : i32, i32, i32
  }
  func.func @transform_2(%arg0: i32) -> (i32, i32, i32) {
    %c0_i32 = arith.constant 0 : i32
    %c0_i32_0 = arith.constant 0 : i32
    %c0_i32_1 = arith.constant 0 : i32
    return %arg0, %c0_i32, %c0_i32_0 : i32, i32, i32
  }
  func.func @transform_3(%arg0: i32) -> (i32, i32) {
    %c0_i32 = arith.constant 0 : i32
    %c0_i32_0 = arith.constant 0 : i32
    %c0_i32_1 = arith.constant 0 : i32
    return %c0_i32, %c0_i32_0 : i32, i32
  }
  func.func @transform_4(%arg0: i32) -> (i32, i32) {
    %c0_i32 = arith.constant 0 : i32
    %c0_i32_0 = arith.constant 0 : i32
    %c0_i32_1 = arith.constant 0 : i32
    return %c0_i32, %c0_i32_0 : i32, i32
  }
  func.func @transform_5(%arg0: i32) -> (i32, i32) {
    %c0_i32 = arith.constant 0 : i32
    %c0_i32_0 = arith.constant 0 : i32
    %c0_i32_1 = arith.constant 0 : i32
    return %c0_i32, %c0_i32_0 : i32, i32
  }
  func.func @transform_6(%arg0: i32) -> (i32, i32) {
    %c0_i32 = arith.constant 0 : i32
    %c0_i32_0 = arith.constant 0 : i32
    %c0_i32_1 = arith.constant 0 : i32
    return %c0_i32, %c0_i32_0 : i32, i32
  }
  func.func @transform_7(%arg0: i32) -> (i32, i32) {
    %c0_i32 = arith.constant 0 : i32
    %c0_i32_0 = arith.constant 0 : i32
    %c0_i32_1 = arith.constant 0 : i32
    return %c0_i32, %c0_i32_0 : i32, i32
  }
  func.func @transform_8(%arg0: i32) -> (i32, i32) {
    %c0_i32 = arith.constant 0 : i32
    %c0_i32_0 = arith.constant 0 : i32
    %c0_i32_1 = arith.constant 0 : i32
    return %c0_i32, %c0_i32_0 : i32, i32
  }
  func.func @transform_9(%arg0: i32) -> (i32, i32, i32) {
    %c0_i32 = arith.constant 0 : i32
    %c0_i32_0 = arith.constant 0 : i32
    %c0_i32_1 = arith.constant 0 : i32
    return %arg0, %c0_i32, %c0_i32_0 : i32, i32, i32
  }
}

</mosaic_0001>

<llo_original>
// kernel: tpu_custom_call.1
$region0: #{tpu_custom_call.1}
  #allocation0 [shape = 'u32[]', space=smem, size = 0x4, offset = 0x4, fixed_abs, tag = 'smem constant byte address 0x4 - core index']
  #allocation1 [shape = 'u32[72,128]{1,0:T(1,128)}', space=vmem, size = 0x9000, scoped, tag = 'internal scratch']
  %s0 = inlined_call_operand.vmem [shape: f32[2,1,12], index: 0, kind: input, shape index: {}]
  %s1 = inlined_call_operand.vmem [shape: bf16[2,12,256], index: 1, kind: input, shape index: {}]
  %s2 = inlined_call_operand.vmem [shape: bf16[2,12,256], index: 2, kind: input, shape index: {}]
  %s3 = inlined_call_operand.vmem [shape: bf16[128,128], index: 3, kind: input, shape index: {}]
  %s4 = inlined_call_operand.hbm [shape: bf16[128,256], index: 4, kind: input, shape index: {}]
  %s5 = inlined_call_operand.hbm [shape: bf16[256,256], index: 5, kind: input, shape index: {}]
  %s6 = inlined_call_operand.vmem [shape: f32[1,256], index: 6, kind: input, shape index: {}]
  %s7 = inlined_call_operand.vmem [shape: f32[1,256], index: 7, kind: input, shape index: {}]
  %s8 = inlined_call_operand.vmem [shape: f32[1,256], index: 8, kind: input, shape index: {}]
  %s9 = inlined_call_operand.vmem [shape: bf16[2,12,256], index: 9, kind: output, shape index: {}]
  %s10 = sld [smem:[#allocation0]]
  $region77: #{tpu_custom_call.1} parent=0
    _
  %s12 = ssub.s32 1, %s10
  %s13 = scalar_select 0, %s12, %s10
  $region1: #{tpu_custom_call.1} parent=0
    #allocation2 [shape = 'u8[65536]{0}', space=vmem, size = 0x10000, scoped, tag = 'input window, operand 4, single buffered']
    #allocation3 [shape = 's32[2]{0}', space=sflag, size = 0x8, scoped, tag = 'scoped memory for tpu_custom_call.1']
    #allocation4 [shape = 'u8[131072]{0}', space=vmem, size = 0x20000, scoped, tag = 'input window, operand 5, single buffered']
    #allocation5 [shape = 's32[1]{0}', space=sflag, size = 0x4, scoped, tag = 'scoped memory for tpu_custom_call.1']
    %14 = vsyncpa [#allocation3], 0
    %15 = vsyncpa [#allocation5], 0
    loop: start=0, step=1, limit=4
    $region2: #{tpu_custom_call.1} parent=1 // loop_pre_header
      _
    $region3: #{tpu_custom_call.1} parent=1 // loop_header
      %s17 = sphi 0, %s21
      %p18 = scmp.ge.s32.totalorder %s17, 4
      %s27 = sphi 0, %s29
      %s30 = sphi 0, %s27
      %s31 = sphi 0, %s30
      %s47 = sphi 0, %s31
      %s53 = sphi 0, %s55
      %s56 = sphi 0, %s53
      %s57 = sphi 0, %s56
      %s73 = sphi 0, %s57
      %s79 = sphi 0, %s81
      %s82 = sphi 0, %s79
      %s83 = sphi 0, %s82
      %s99 = sphi 0, %s83
      %s103 = sphi 0, %s103
      %s105 = sphi 0, %s103
      %s106 = sphi 0, %s105
      %s120 = sphi 0, %s106
      %s124 = sphi 0, %s124
      %s126 = sphi 0, %s124
      %s127 = sphi 0, %s126
      %s141 = sphi 0, %s127
      %s145 = sphi 0, %s145
      %s147 = sphi 0, %s145
      %s148 = sphi 0, %s147
      %s162 = sphi 0, %s148
      %s166 = sphi 0, %s166
      %s168 = sphi 0, %s166
      %s169 = sphi 0, %s168
      %s183 = sphi 0, %s169
      %s187 = sphi 0, %s187
      %s189 = sphi 0, %s187
      %s190 = sphi 0, %s189
      %s204 = sphi 0, %s190
      %s208 = sphi 0, %s208
      %s210 = sphi 0, %s208
      %s211 = sphi 0, %s210
      %s225 = sphi 0, %s211
      %s231 = sphi 0, %s233
      %s234 = sphi 0, %s231
      %s235 = sphi 0, %s234
      %s251 = sphi 0, %s235
    $region4: #{tpu_custom_call.1} parent=1 // loop_header_branch
      %20 = sbr.rel (%p18) target = $region8
    $region5: #{tpu_custom_call.1} parent=1 // loop_body
      %s22 = ssub.s32 %s17, 1
      %s23 = ssub.s32 %s17, 2
      %s24 = sadd.s32 %s17, 1
      %s25 = ssub.s32 %s17, %s24
      %p26 = scmp.eq.s32.totalorder %s25, 0
      %s28 = sadd.s32 %s27, 1
      %s29 = scalar_select %p26, %s27, %s28
      %p32 = pneg %p26
      %p33 = scmp.eq.s32.totalorder %s17, 1
      %p34 = por %p32, %p33
      %p35 = scmp.ne.s32.totalorder %s27, %s30
      %p36 = scmp.eq.s32.totalorder %s17, 0
      %p37 = por %p35, %p36
      %p38 = scmp.ne.s32.totalorder %s27, %s30
      %p39 = scmp.eq.s32.totalorder %s22, 1
      %p40 = por %p38, %p39
      %p41 = scmp.ne.s32.totalorder %s30, %s31
      %p42 = scmp.eq.s32.totalorder %s22, 0
      %p43 = por %p41, %p42
      %p44 = scmp.ne.s32.totalorder %s30, %s31
      %p45 = scmp.eq.s32.totalorder %s23, 1
      %p46 = por %p44, %p45
      %p48 = scmp.ne.s32.totalorder %s31, %s47
      %p49 = scmp.eq.s32.totalorder %s23, 0
      %p50 = por %p48, %p49
      %s51 = ssub.s32 %s17, %s24
      %p52 = scmp.eq.s32.totalorder %s51, 0
      %s54 = sadd.s32 %s53, 1
      %s55 = scalar_select %p52, %s53, %s54
      %p58 = pneg %p52
      %p59 = scmp.eq.s32.totalorder %s17, 1
      %p60 = por %p58, %p59
      %p61 = scmp.ne.s32.totalorder %s53, %s56
      %p62 = scmp.eq.s32.totalorder %s17, 0
      %p63 = por %p61, %p62
      %p64 = scmp.ne.s32.totalorder %s53, %s56
      %p65 = scmp.eq.s32.totalorder %s22, 1
      %p66 = por %p64, %p65
      %p67 = scmp.ne.s32.totalorder %s56, %s57
      %p68 = scmp.eq.s32.totalorder %s22, 0
      %p69 = por %p67, %p68
      %p70 = scmp.ne.s32.totalorder %s56, %s57
      %p71 = scmp.eq.s32.totalorder %s23, 1
      %p72 = por %p70, %p71
      %p74 = scmp.ne.s32.totalorder %s57, %s73
      %p75 = scmp.eq.s32.totalorder %s23, 0
      %p76 = por %p74, %p75
      %s77 = ssub.s32 %s17, %s24
      %p78 = scmp.eq.s32.totalorder %s77, 0
      %s80 = sadd.s32 %s79, 1
      %s81 = scalar_select %p78, %s79, %s80
      %p84 = pneg %p78
      %p85 = scmp.eq.s32.totalorder %s17, 1
      %p86 = por %p84, %p85
      %p87 = scmp.ne.s32.totalorder %s79, %s82
      %p88 = scmp.eq.s32.totalorder %s17, 0
      %p89 = por %p87, %p88
      %p90 = scmp.ne.s32.totalorder %s79, %s82
      %p91 = scmp.eq.s32.totalorder %s22, 1
      %p92 = por %p90, %p91
      %p93 = scmp.ne.s32.totalorder %s82, %s83
      %p94 = scmp.eq.s32.totalorder %s22, 0
      %p95 = por %p93, %p94
      %p96 = scmp.ne.s32.totalorder %s82, %s83
      %p97 = scmp.eq.s32.totalorder %s23, 1
      %p98 = por %p96, %p97
      %p100 = scmp.ne.s32.totalorder %s83, %s99
      %p101 = scmp.eq.s32.totalorder %s23, 0
      %p102 = por %p100, %p101
      %s104 = sadd.s32 %s103, 1
      %p107 = scmp.eq.s32.totalorder %s17, 1
      %p108 = scmp.ne.s32.totalorder %s103, %s105
      %p109 = scmp.eq.s32.totalorder %s17, 0
      %p110 = por %p108, %p109
      %p111 = scmp.ne.s32.totalorder %s103, %s105
      %p112 = scmp.eq.s32.totalorder %s22, 1
      %p113 = por %p111, %p112
      %p114 = scmp.ne.s32.totalorder %s105, %s106
      %p115 = scmp.eq.s32.totalorder %s22, 0
      %p116 = por %p114, %p115
      %p117 = scmp.ne.s32.totalorder %s105, %s106
      %p118 = scmp.eq.s32.totalorder %s23, 1
      %p119 = por %p117, %p118
      %p121 = scmp.ne.s32.totalorder %s106, %s120
      %p122 = scmp.eq.s32.totalorder %s23, 0
      %p123 = por %p121, %p122
      %s125 = sadd.s32 %s124, 1
      %p128 = scmp.eq.s32.totalorder %s17, 1
      %p129 = scmp.ne.s32.totalorder %s124, %s126
      %p130 = scmp.eq.s32.totalorder %s17, 0
      %p131 = por %p129, %p130
      %p132 = scmp.ne.s32.totalorder %s124, %s126
      %p133 = scmp.eq.s32.totalorder %s22, 1
      %p134 = por %p132, %p133
      %p135 = scmp.ne.s32.totalorder %s126, %s127
      %p136 = scmp.eq.s32.totalorder %s22, 0
      %p137 = por %p135, %p136
      %p138 = scmp.ne.s32.totalorder %s126, %s127
      %p139 = scmp.eq.s32.totalorder %s23, 1
      %p140 = por %p138, %p139
      %p142 = scmp.ne.s32.totalorder %s127, %s141
      %p143 = scmp.eq.s32.totalorder %s23, 0
      %p144 = por %p142, %p143
      %s146 = sadd.s32 %s145, 1
      %p149 = scmp.eq.s32.totalorder %s17, 1
      %p150 = scmp.ne.s32.totalorder %s145, %s147
      %p151 = scmp.eq.s32.totalorder %s17, 0
      %p152 = por %p150, %p151
      %p153 = scmp.ne.s32.totalorder %s145, %s147
      %p154 = scmp.eq.s32.totalorder %s22, 1
      %p155 = por %p153, %p154
      %p156 = scmp.ne.s32.totalorder %s147, %s148
      %p157 = scmp.eq.s32.totalorder %s22, 0
      %p158 = por %p156, %p157
      %p159 = scmp.ne.s32.totalorder %s147, %s148
      %p160 = scmp.eq.s32.totalorder %s23, 1
      %p161 = por %p159, %p160
      %p163 = scmp.ne.s32.totalorder %s148, %s162
      %p164 = scmp.eq.s32.totalorder %s23, 0
      %p165 = por %p163, %p164
      %s167 = sadd.s32 %s166, 1
      %p170 = scmp.eq.s32.totalorder %s17, 1
      %p171 = scmp.ne.s32.totalorder %s166, %s168
      %p172 = scmp.eq.s32.totalorder %s17, 0
      %p173 = por %p171, %p172
      %p174 = scmp.ne.s32.totalorder %s166, %s168
      %p175 = scmp.eq.s32.totalorder %s22, 1
      %p176 = por %p174, %p175
      %p177 = scmp.ne.s32.totalorder %s168, %s169
      %p178 = scmp.eq.s32.totalorder %s22, 0
      %p179 = por %p177, %p178
      %p180 = scmp.ne.s32.totalorder %s168, %s169
      %p181 = scmp.eq.s32.totalorder %s23, 1
      %p182 = por %p180, %p181
      %p184 = scmp.ne.s32.totalorder %s169, %s183
      %p185 = scmp.eq.s32.totalorder %s23, 0
      %p186 = por %p184, %p185
      %s188 = sadd.s32 %s187, 1
      %p191 = scmp.eq.s32.totalorder %s17, 1
      %p192 = scmp.ne.s32.totalorder %s187, %s189
      %p193 = scmp.eq.s32.totalorder %s17, 0
      %p194 = por %p192, %p193
      %p195 = scmp.ne.s32.totalorder %s187, %s189
      %p196 = scmp.eq.s32.totalorder %s22, 1
      %p197 = por %p195, %p196
      %p198 = scmp.ne.s32.totalorder %s189, %s190
      %p199 = scmp.eq.s32.totalorder %s22, 0
      %p200 = por %p198, %p199
      %p201 = scmp.ne.s32.totalorder %s189, %s190
      %p202 = scmp.eq.s32.totalorder %s23, 1
      %p203 = por %p201, %p202
      %p205 = scmp.ne.s32.totalorder %s190, %s204
      %p206 = scmp.eq.s32.totalorder %s23, 0
      %p207 = por %p205, %p206
      %s209 = sadd.s32 %s208, 1
      %p212 = scmp.eq.s32.totalorder %s17, 1
      %p213 = scmp.ne.s32.totalorder %s208, %s210
      %p214 = scmp.eq.s32.totalorder %s17, 0
      %p215 = por %p213, %p214
      %p216 = scmp.ne.s32.totalorder %s208, %s210
      %p217 = scmp.eq.s32.totalorder %s22, 1
      %p218 = por %p216, %p217
      %p219 = scmp.ne.s32.totalorder %s210, %s211
      %p220 = scmp.eq.s32.totalorder %s22, 0
      %p221 = por %p219, %p220
      %p222 = scmp.ne.s32.totalorder %s210, %s211
      %p223 = scmp.eq.s32.totalorder %s23, 1
      %p224 = por %p222, %p223
      %p226 = scmp.ne.s32.totalorder %s211, %s225
      %p227 = scmp.eq.s32.totalorder %s23, 0
      %p228 = por %p226, %p227
      %s229 = ssub.s32 %s17, %s24
      %p230 = scmp.eq.s32.totalorder %s229, 0
      %s232 = sadd.s32 %s231, 1
      %s233 = scalar_select %p230, %s231, %s232
      %p236 = pneg %p230
      %p237 = scmp.eq.s32.totalorder %s17, 1
      %p238 = por %p236, %p237
      %p239 = scmp.ne.s32.totalorder %s231, %s234
      %p240 = scmp.eq.s32.totalorder %s17, 0
      %p241 = por %p239, %p240
      %p242 = scmp.ne.s32.totalorder %s231, %s234
      %p243 = scmp.eq.s32.totalorder %s22, 1
      %p244 = por %p242, %p243
      %p245 = scmp.ne.s32.totalorder %s234, %s235
      %p246 = scmp.eq.s32.totalorder %s22, 0
      %p247 = por %p245, %p246
      %p248 = scmp.ne.s32.totalorder %s234, %s235
      %p249 = scmp.eq.s32.totalorder %s23, 1
      %p250 = por %p248, %p249
      %p252 = scmp.ne.s32.totalorder %s235, %s251
      %p253 = scmp.eq.s32.totalorder %s23, 0
      %p254 = por %p252, %p253
      %p255 = scmp.le.s32.totalorder 1, %s17
      %p256 = scmp.lt.s32.totalorder %s17, 3
      %p257 = pnand %p255, %p256
      %p258 = pneg %p257
      // Predicated region
      $region9: #{tpu_custom_call.1} parent=5 // pred_check
        _
      $region10: #{tpu_custom_call.1} parent=5 // pred_check_branch
        %260 = sbr.rel (%p257) target = $region12
      $region11: #{tpu_custom_call.1} parent=5 // pred_region
        %s261 = ssub.s32 %s17, 1
        // Predicated region
        $region13: #{tpu_custom_call.1} parent=11 // pred_check
          %p262 = pneg %p116
        $region14: #{tpu_custom_call.1} parent=11 // pred_check_branch
          %264 = sbr.rel (%p262) target = $region16
        $region15: #{tpu_custom_call.1} parent=11 // pred_region
          _
        $region16: #{tpu_custom_call.1} parent=11 // pred_fallthru
          _
        // Predicated region
        $region17: #{tpu_custom_call.1} parent=11 // pred_check
          %p265 = pneg %p137
        $region18: #{tpu_custom_call.1} parent=11 // pred_check_branch
          %267 = sbr.rel (%p265) target = $region20
        $region19: #{tpu_custom_call.1} parent=11 // pred_region
          %269 = vsyncadd [#allocation3], 0
          %s270 = sshll.u32 %s4, 4
          %s271 = int_to_ptr.hbm [resolvable:$true] %s270
          %s272 = sshll.u32 [#allocation2], 4
          %s273 = int_to_ptr.vmem [resolvable:$true] %s272
          %278 = dma.hbm_to_vmem [thread:$0]  %s271, 2048, %s273, [#allocation3], 128, 128, 8
        $region20: #{tpu_custom_call.1} parent=11 // pred_fallthru
          _
        // Predicated region
        $region21: #{tpu_custom_call.1} parent=11 // pred_check
          %p279 = pneg %p158
        $region22: #{tpu_custom_call.1} parent=11 // pred_check_branch
          %281 = sbr.rel (%p279) target = $region24
        $region23: #{tpu_custom_call.1} parent=11 // pred_region
          %283 = vsyncadd [#allocation5], 0
          %s284 = sshll.u32 %s5, 4
          %s285 = int_to_ptr.hbm [resolvable:$true] %s284
          %s286 = sshll.u32 [#allocation4], 4
          %s287 = int_to_ptr.vmem [resolvable:$true] %s286
          %292 = dma.hbm_to_vmem [thread:$0]  %s285, 4096, %s287, [#allocation5], 128, 128, 8
        $region24: #{tpu_custom_call.1} parent=11 // pred_fallthru
          _
        // Predicated region
        $region25: #{tpu_custom_call.1} parent=11 // pred_check
          %p293 = pneg %p179
        $region26: #{tpu_custom_call.1} parent=11 // pred_check_branch
          %295 = sbr.rel (%p293) target = $region28
        $region27: #{tpu_custom_call.1} parent=11 // pred_region
          _
        $region28: #{tpu_custom_call.1} parent=11 // pred_fallthru
          _
        // Predicated region
        $region29: #{tpu_custom_call.1} parent=11 // pred_check
          %p296 = pneg %p200
        $region30: #{tpu_custom_call.1} parent=11 // pred_check_branch
          %298 = sbr.rel (%p296) target = $region32
        $region31: #{tpu_custom_call.1} parent=11 // pred_region
          _
        $region32: #{tpu_custom_call.1} parent=11 // pred_fallthru
          _
        // Predicated region
        $region33: #{tpu_custom_call.1} parent=11 // pred_check
          %p299 = pneg %p221
        $region34: #{tpu_custom_call.1} parent=11 // pred_check_branch
          %301 = sbr.rel (%p299) target = $region36
        $region35: #{tpu_custom_call.1} parent=11 // pred_region
          _
        $region36: #{tpu_custom_call.1} parent=11 // pred_fallthru
          _
      $region12: #{tpu_custom_call.1} parent=5 // pred_fallthru
        _
      %p302 = scmp.lt.s32.totalorder %s17, 2
      // Predicated region
      $region37: #{tpu_custom_call.1} parent=5 // pred_check
        %p303 = pneg %p302
      $region38: #{tpu_custom_call.1} parent=5 // pred_check_branch
        %305 = sbr.rel (%p303) target = $region40
      $region39: #{tpu_custom_call.1} parent=5 // pred_region
        // Predicated region
        $region41: #{tpu_custom_call.1} parent=39 // pred_check
          %p306 = pneg %p37
        $region42: #{tpu_custom_call.1} parent=39 // pred_check_branch
          %308 = sbr.rel (%p306) target = $region44
        $region43: #{tpu_custom_call.1} parent=39 // pred_region
          %p309 = scmp.lt.s32.totalorder %s17, 1
          %s310 = scalar_select %p309, %s17, 1
          %s311 = scalar_lea.vmem %s0, %s310
        $region44: #{tpu_custom_call.1} parent=39 // pred_fallthru
          _
        // Predicated region
        $region45: #{tpu_custom_call.1} parent=39 // pred_check
          %p312 = pneg %p63
        $region46: #{tpu_custom_call.1} parent=39 // pred_check_branch
          %314 = sbr.rel (%p312) target = $region48
        $region47: #{tpu_custom_call.1} parent=39 // pred_region
          %p315 = scmp.lt.s32.totalorder %s17, 1
          %s316 = scalar_select %p315, %s17, 1
          %s317 = smul.addr %s316, 4
          %s318 = smul.addr %s317, 4
          %s319 = scalar_lea.vmem %s1, %s318
        $region48: #{tpu_custom_call.1} parent=39 // pred_fallthru
          _
        // Predicated region
        $region49: #{tpu_custom_call.1} parent=39 // pred_check
          %p320 = pneg %p89
        $region50: #{tpu_custom_call.1} parent=39 // pred_check_branch
          %322 = sbr.rel (%p320) target = $region52
        $region51: #{tpu_custom_call.1} parent=39 // pred_region
          %p323 = scmp.lt.s32.totalorder %s17, 1
          %s324 = scalar_select %p323, %s17, 1
          %s325 = smul.addr %s324, 4
          %s326 = smul.addr %s325, 4
          %s327 = scalar_lea.vmem %s2, %s326
        $region52: #{tpu_custom_call.1} parent=39 // pred_fallthru
          _
      $region40: #{tpu_custom_call.1} parent=5 // pred_fallthru
        _
      %p328 = scmp.le.s32.totalorder 1, %s17
      %p329 = scmp.lt.s32.totalorder %s17, 3
      %p330 = pnand %p328, %p329
      %p331 = pneg %p330
      // Predicated region
      $region53: #{tpu_custom_call.1} parent=5 // pred_check
        _
      $region54: #{tpu_custom_call.1} parent=5 // pred_check_branch
        %333 = sbr.rel (%p330) target = $region56
      $region55: #{tpu_custom_call.1} parent=5 // pred_region
        %s334 = ssub.s32 %s17, 1
        // Predicated region
        $region57: #{tpu_custom_call.1} parent=55 // pred_check
          %p335 = pneg %p137
        $region58: #{tpu_custom_call.1} parent=55 // pred_check_branch
          %337 = sbr.rel (%p335) target = $region60
        $region59: #{tpu_custom_call.1} parent=55 // pred_region
          %339 = dma.done [#allocation3], 2048
        $region60: #{tpu_custom_call.1} parent=55 // pred_fallthru
          _
        // Predicated region
        $region61: #{tpu_custom_call.1} parent=55 // pred_check
          %p340 = pneg %p158
        $region62: #{tpu_custom_call.1} parent=55 // pred_check_branch
          %342 = sbr.rel (%p340) target = $region64
        $region63: #{tpu_custom_call.1} parent=55 // pred_region
          %344 = dma.done [#allocation5], 4096
        $region64: #{tpu_custom_call.1} parent=55 // pred_fallthru
          _
        %p345 = scmp.lt.s32.totalorder %s22, 1
        %s346 = scalar_select %p345, %s22, 1
        %s347 = scalar_lea.vmem %s0, %s346
        %p348 = pneg %p43
        %p349 = pneg %p40
        %p350 = scmp.lt.s32.totalorder %s22, 1
        %s351 = scalar_select %p350, %s22, 1
        %s352 = smul.addr %s351, 4
        %s353 = smul.addr %s352, 4
        %s354 = scalar_lea.vmem %s1, %s353
        %p355 = pneg %p69
        %p356 = pneg %p66
        %p357 = scmp.lt.s32.totalorder %s22, 1
        %s358 = scalar_select %p357, %s22, 1
        %s359 = smul.addr %s358, 4
        %s360 = smul.addr %s359, 4
        %s361 = scalar_lea.vmem %s2, %s360
        %p362 = pneg %p95
        %p363 = pneg %p92
        %p364 = pneg %p116
        %p365 = pneg %p113
        %p366 = pneg %p137
        %p367 = pneg %p134
        %p368 = pneg %p158
        %p369 = pneg %p155
        %p370 = pneg %p179
        %p371 = pneg %p176
        %p372 = pneg %p200
        %p373 = pneg %p197
        %p374 = pneg %p221
        %p375 = pneg %p218
        %p376 = pneg %p247
        %p377 = pneg %p244
        %p378 = scmp.lt.s32.totalorder %s22, 1
        %s379 = scalar_select %p378, %s22, 1
        %s380 = smul.addr %s379, 4
        %s381 = smul.addr %s380, 4
        %s382 = scalar_lea.vmem %s9, %s381
        %p383 = scmp.lt.s32.totalorder %s22, 1
        %s384 = scalar_select %p383, %s22, 1
        %s385 = scalar_lea.vmem %s0, %s384
        %p386 = scmp.lt.s32.totalorder %s22, 1
        %s387 = scalar_select %p386, %s22, 1
        %s388 = smul.addr %s387, 4
        %s389 = smul.addr %s388, 4
        %s390 = scalar_lea.vmem %s1, %s389
        %p391 = scmp.lt.s32.totalorder %s22, 1
        %s392 = scalar_select %p391, %s22, 1
        %s393 = smul.addr %s392, 4
        %s394 = smul.addr %s393, 4
        %s395 = scalar_lea.vmem %s2, %s394
        %p396 = scmp.lt.s32.totalorder %s22, 1
        %s397 = scalar_select %p396, %s22, 1
        %s398 = smul.addr %s397, 4
        %s399 = smul.addr %s398, 4
        %s400 = scalar_lea.vmem %s9, %s399
        %v402 = vld [vmem:[%s390] sm:$0xff]
        %v403 = vld [vmem:[%s390 + $0x8] sm:$0x33]
        %v404 = vld [vmem:[%s395] sm:$0xff]
        %v405 = vld [vmem:[%s395 + $0x8] sm:$0x33]
        %v406 = vld [vmem:[%s385] sm:$0x1]
        %vm407 = vcmp.ne.f32.partialorder %v406, 0.0
        %v408 = vsel %vm407, 1, 0
        %v409 = vperm.slane %v408, 0
        %vm410 = vcmp.eq.s32.totalorder %v409, 1
        %v411 = vld [vmem:[%s6] sm:$0x3]
        %v413 = vperm.slane %v411, 0
        %v414 = vperm.slane %v411, 1
        %v417 = vld [vmem:[%s3] sm:$0xf]
        %v418 = vld [vmem:[%s3 + $0x4] sm:$0xf]
        %v419 = vld [vmem:[%s3 + $0x8] sm:$0xf]
        %v420 = vld [vmem:[%s3 + $0xc] sm:$0xf]
        %v421 = vld [vmem:[%s3 + $0x10] sm:$0xf]
        %v422 = vld [vmem:[%s3 + $0x14] sm:$0xf]
        %v423 = vld [vmem:[%s3 + $0x18] sm:$0xf]
        %v424 = vld [vmem:[%s3 + $0x1c] sm:$0xf]
        %v425 = vld [vmem:[%s3 + $0x20] sm:$0xf]
        %v426 = vld [vmem:[%s3 + $0x24] sm:$0xf]
        %v427 = vld [vmem:[%s3 + $0x28] sm:$0xf]
        %v428 = vld [vmem:[%s3 + $0x2c] sm:$0xf]
        %v429 = vld [vmem:[%s3 + $0x30] sm:$0xf]
        %v430 = vld [vmem:[%s3 + $0x34] sm:$0xf]
        %v431 = vld [vmem:[%s3 + $0x38] sm:$0xf]
        %v432 = vld [vmem:[%s3 + $0x3c] sm:$0xf]
        %v435 = vunpack.c.l.b16 %v402
        %v436 = vunpack.c.l.b16 %v403
        %v437 = vpack.c.b16 %v436, %v435
        %v455 = vunpack.c.l.b16 %v417
        %v456 = vunpack.c.l.b16 %v418
        %v457 = vunpack.c.l.b16 %v419
        %v458 = vunpack.c.l.b16 %v420
        %v459 = vunpack.c.l.b16 %v421
        %v460 = vunpack.c.l.b16 %v422
        %v461 = vunpack.c.l.b16 %v423
        %v462 = vunpack.c.l.b16 %v424
        %v463 = vunpack.c.l.b16 %v425
        %v464 = vunpack.c.l.b16 %v426
        %v465 = vunpack.c.l.b16 %v427
        %v466 = vunpack.c.l.b16 %v428
        %v467 = vunpack.c.l.b16 %v429
        %v468 = vunpack.c.l.b16 %v430
        %v469 = vunpack.c.l.b16 %v431
        %v470 = vunpack.c.l.b16 %v432
        %v471 = vpack.c.b16 %v456, %v455
        %v472 = vpack.c.b16 %v458, %v457
        %v473 = vpack.c.b16 %v460, %v459
        %v474 = vpack.c.b16 %v462, %v461
        %v475 = vpack.c.b16 %v464, %v463
        %v476 = vpack.c.b16 %v466, %v465
        %v477 = vpack.c.b16 %v468, %v467
        %v478 = vpack.c.b16 %v470, %v469
        %487 = vmatpush.bf16.msra.mxu0 %v478
        %488 = vmatpush.bf16.msra.mxu0 %v477
        %489 = vmatpush.bf16.msra.mxu0 %v476
        %490 = vmatpush.bf16.msra.mxu0 %v475
        %491 = vmatpush.bf16.msra.mxu0 %v474
        %492 = vmatpush.bf16.msra.mxu0 %v473
        %493 = vmatpush.bf16.msra.mxu0 %v472
        %494 = vmatpush.bf16.msra.mxu0 %v471
        %495 = vmatmul.bf16.gmra.mxu0 %v437
        %v496 = vpop.f32.mrf.mxu0
        %v497 = vadd.f32 0.0, %v496
        %v498 = vpop.f32.mrf.mxu0
        %v499 = vadd.f32 0.0, %v498
        %500 = vdwg.mxu0
        %v501 = vpack.c.bf16 %v499, %v497
        %v502 = vld [vmem:[#allocation2] sm:$0xff]
        %v503 = vld [vmem:[#allocation2 + $0x8] sm:$0xff]
        %v504 = vld [vmem:[#allocation2 + $0x10] sm:$0xff]
        %v505 = vld [vmem:[#allocation2 + $0x18] sm:$0xff]
        %v506 = vld [vmem:[#allocation2 + $0x20] sm:$0xff]
        %v507 = vld [vmem:[#allocation2 + $0x28] sm:$0xff]
        %v508 = vld [vmem:[#allocation2 + $0x30] sm:$0xff]
        %v509 = vld [vmem:[#allocation2 + $0x38] sm:$0xff]
        %v510 = vld [vmem:[#allocation2 + $0x40] sm:$0xff]
        %v511 = vld [vmem:[#allocation2 + $0x48] sm:$0xff]
        %v512 = vld [vmem:[#allocation2 + $0x50] sm:$0xff]
        %v513 = vld [vmem:[#allocation2 + $0x58] sm:$0xff]
        %v514 = vld [vmem:[#allocation2 + $0x60] sm:$0xff]
        %v515 = vld [vmem:[#allocation2 + $0x68] sm:$0xff]
        %v516 = vld [vmem:[#allocation2 + $0x70] sm:$0xff]
        %v517 = vld [vmem:[#allocation2 + $0x78] sm:$0xff]
        %v520 = vunpack.c.l.b16 %v404
        %v521 = vunpack.c.l.b16 %v405
        %v522 = vpack.c.b16 %v521, %v520
        %v540 = vunpack.c.l.b16 %v502
        %v541 = vunpack.c.h.b16 %v502
        %v542 = vunpack.c.l.b16 %v503
        %v543 = vunpack.c.h.b16 %v503
        %v544 = vunpack.c.l.b16 %v504
        %v545 = vunpack.c.h.b16 %v504
        %v546 = vunpack.c.l.b16 %v505
        %v547 = vunpack.c.h.b16 %v505
        %v548 = vunpack.c.l.b16 %v506
        %v549 = vunpack.c.h.b16 %v506
        %v550 = vunpack.c.l.b16 %v507
        %v551 = vunpack.c.h.b16 %v507
        %v552 = vunpack.c.l.b16 %v508
        %v553 = vunpack.c.h.b16 %v508
        %v554 = vunpack.c.l.b16 %v509
        %v555 = vunpack.c.h.b16 %v509
        %v556 = vunpack.c.l.b16 %v510
        %v557 = vunpack.c.h.b16 %v510
        %v558 = vunpack.c.l.b16 %v511
        %v559 = vunpack.c.h.b16 %v511
        %v560 = vunpack.c.l.b16 %v512
        %v561 = vunpack.c.h.b16 %v512
        %v562 = vunpack.c.l.b16 %v513
        %v563 = vunpack.c.h.b16 %v513
        %v564 = vunpack.c.l.b16 %v514
        %v565 = vunpack.c.h.b16 %v514
        %v566 = vunpack.c.l.b16 %v515
        %v567 = vunpack.c.h.b16 %v515
        %v568 = vunpack.c.l.b16 %v516
        %v569 = vunpack.c.h.b16 %v516
        %v570 = vunpack.c.l.b16 %v517
        %v571 = vunpack.c.h.b16 %v517
        %v572 = vpack.c.b16 %v542, %v540
        %v573 = vpack.c.b16 %v543, %v541
        %v574 = vpack.c.b16 %v546, %v544
        %v575 = vpack.c.b16 %v547, %v545
        %v576 = vpack.c.b16 %v550, %v548
        %v577 = vpack.c.b16 %v551, %v549
        %v578 = vpack.c.b16 %v554, %v552
        %v579 = vpack.c.b16 %v555, %v553
        %v580 = vpack.c.b16 %v558, %v556
        %v581 = vpack.c.b16 %v559, %v557
        %v582 = vpack.c.b16 %v562, %v560
        %v583 = vpack.c.b16 %v563, %v561
        %v584 = vpack.c.b16 %v566, %v564
        %v585 = vpack.c.b16 %v567, %v565
        %v586 = vpack.c.b16 %v570, %v568
        %v587 = vpack.c.b16 %v571, %v569
        %604 = vmatpush.bf16.msra.mxu0 %v586
        %605 = vmatpush.bf16.msra.mxu0 %v584
        %606 = vmatpush.bf16.msra.mxu0 %v582
        %607 = vmatpush.bf16.msra.mxu0 %v580
        %608 = vmatpush.bf16.msra.mxu0 %v578
        %609 = vmatpush.bf16.msra.mxu0 %v576
        %610 = vmatpush.bf16.msra.mxu0 %v574
        %611 = vmatpush.bf16.msra.mxu0 %v572
        %612 = vmatmul.bf16.gmra.mxu0 %v522
        %v613 = vpop.f32.mrf.mxu0
        %v614 = vadd.f32 0.0, %v613
        %v615 = vpop.f32.mrf.mxu0
        %v616 = vadd.f32 0.0, %v615
        %617 = vdwg.mxu0
        %618 = vmatpush.bf16.msra.mxu0 %v587
        %619 = vmatpush.bf16.msra.mxu0 %v585
        %620 = vmatpush.bf16.msra.mxu0 %v583
        %621 = vmatpush.bf16.msra.mxu0 %v581
        %622 = vmatpush.bf16.msra.mxu0 %v579
        %623 = vmatpush.bf16.msra.mxu0 %v577
        %624 = vmatpush.bf16.msra.mxu0 %v575
        %625 = vmatpush.bf16.msra.mxu0 %v573
        %626 = vmatmul.bf16.gmra.mxu0 %v522
        %v627 = vpop.f32.mrf.mxu0
        %v628 = vadd.f32 0.0, %v627
        %v629 = vpop.f32.mrf.mxu0
        %v630 = vadd.f32 0.0, %v629
        %631 = vdwg.mxu0
        %v632 = vpack.c.bf16 %v616, %v614
        %v633 = vpack.c.bf16 %v630, %v628
        %634 = vmatpush.bf16.xpose.msra.mxu0 0
        %635 = vmatpush.bf16.xpose.msra.mxu0 0
        %636 = vmatpush.bf16.xpose.msra.mxu0 0
        %637 = vmatpush.bf16.xpose.msra.mxu0 0
        %638 = vmatpush.bf16.xpose.msra.mxu0 0
        %639 = vmatpush.bf16.xpose.msra.mxu0 0
        %640 = vmatpush.bf16.xpose.msra.mxu0 0
        %641 = vmatpush.bf16.xpose.msra.mxu0 %v632
        %642 = vmatmul.bf16.gmra.mxu0 %v501
        %v643 = vpop.f32.mrf.mxu0
        %v644 = vadd.f32 0.0, %v643
        %v645 = vpop.f32.mrf.mxu0
        %v646 = vadd.f32 0.0, %v645
        %647 = vdwg.mxu0
        %v648 = vsel %vm410, %v644, -1e+20
        %v649 = vsel %vm410, %v646, -1e+20
        %v650 = vmul.f32 %v648, 0.0625
        %v651 = vmul.f32 %v649, 0.0625
        %vm652 = vcmask 97280
        %v653 = vsel %vm652, %v650, -inf
        %654 = vmax.xlane.f32.xlu0 %v653
        %v655 = vpop.xlane.xlu0 %654
        %vm656 = vcmask 93184
        %v657 = vsel %vm656, %v651, -inf
        %658 = vmax.xlane.f32.xlu0 %v657
        %v659 = vpop.xlane.xlu0 %658
        %v660 = vsub.f32 %v650, %v655
        %v661 = vsub.f32 %v651, %v659
        %v662 = vmul.f32 %v660, 1.442695
        %v663 = vpow.pop %v662
        %v664 = vmul.f32 %v661, 1.442695
        %v665 = vpow.pop %v664
        %v666 = vsel %vm652, %v663, 0.0
        %667 = vadd.xlane.f32.xlu0 %v666
        %v668 = vpop.xlane.xlu0 %667
        %v669 = vsel %vm656, %v665, 0.0
        %670 = vadd.xlane.f32.xlu0 %v669
        %v671 = vpop.xlane.xlu0 %670
        %v672 = vrcp.pop %v668
        %v673 = vmul.f32 %v668, %v672
        %v674 = vsub.f32 1.0, %v673
        %v675 = vmul.f32 %v672, %v674
        %v676 = vadd.f32 %v672, %v675
        %vm677 = vweird.f32 %v668
        %vm678 = vweird.f32 %v672
        %vm679 = vmor %vm677, %vm678
        %v680 = vsel %vm679, %v672, %v676
        %v681 = vand.u32 2147483647, %v668
        %vm682 = vcmp.eq.f32.partialorder %v681, 8.507059e+37
        %v683 = vand.u32 %v668, 2147483648
        %v684 = vor.u32 1.1754944e-38, %v683
        %v685 = vsel %vm682, %v684, %v680
        %v686 = vmul.f32 %v663, %v685
        %v687 = vrcp.pop %v671
        %v688 = vmul.f32 %v671, %v687
        %v689 = vsub.f32 1.0, %v688
        %v690 = vmul.f32 %v687, %v689
        %v691 = vadd.f32 %v687, %v690
        %vm692 = vweird.f32 %v671
        %vm693 = vweird.f32 %v687
        %vm694 = vmor %vm692, %vm693
        %v695 = vsel %vm694, %v687, %v691
        %v696 = vand.u32 2147483647, %v671
        %vm697 = vcmp.eq.f32.partialorder %v696, 8.507059e+37
        %v698 = vand.u32 %v671, 2147483648
        %v699 = vor.u32 1.1754944e-38, %v698
        %v700 = vsel %vm697, %v699, %v695
        %v701 = vmul.f32 %v665, %v700
        %v702 = vpack.c.bf16 %v701, %v686
        %v704 = vsel %vm652, %v702, 0
        %vm706 = vcmask 1045504
        %v708 = vsel %vm706, %v633, 0
        %710 = vmatpush.bf16.msra.mxu0 0
        %711 = vmatpush.bf16.msra.mxu0 0
        %712 = vmatpush.bf16.msra.mxu0 0
        %713 = vmatpush.bf16.msra.mxu0 0
        %714 = vmatpush.bf16.msra.mxu0 0
        %715 = vmatpush.bf16.msra.mxu0 0
        %716 = vmatpush.bf16.msra.mxu0 0
        %717 = vmatpush.bf16.msra.mxu0 %v708
        %718 = vmatmul.bf16.gmra.mxu0 %v704
        %v719 = vpop.f32.mrf.mxu0
        %v720 = vadd.f32 0.0, %v719
        %v721 = vpop.f32.mrf.mxu0
        %v722 = vadd.f32 0.0, %v721
        %723 = vdwg.mxu0
        %v724 = vpack.c.bf16 %v722, %v720
        %v725 = vld [vmem:[#allocation4] sm:$0xff]
        %v726 = vld [vmem:[#allocation4 + $0x8] sm:$0xff]
        %v727 = vld [vmem:[#allocation4 + $0x10] sm:$0xff]
        %v728 = vld [vmem:[#allocation4 + $0x18] sm:$0xff]
        %v729 = vld [vmem:[#allocation4 + $0x20] sm:$0xff]
        %v730 = vld [vmem:[#allocation4 + $0x28] sm:$0xff]
        %v731 = vld [vmem:[#allocation4 + $0x30] sm:$0xff]
        %v732 = vld [vmem:[#allocation4 + $0x38] sm:$0xff]
        %v733 = vld [vmem:[#allocation4 + $0x40] sm:$0xff]
        %v734 = vld [vmem:[#allocation4 + $0x48] sm:$0xff]
        %v735 = vld [vmem:[#allocation4 + $0x50] sm:$0xff]
        %v736 = vld [vmem:[#allocation4 + $0x58] sm:$0xff]
        %v737 = vld [vmem:[#allocation4 + $0x60] sm:$0xff]
        %v738 = vld [vmem:[#allocation4 + $0x68] sm:$0xff]
        %v739 = vld [vmem:[#allocation4 + $0x70] sm:$0xff]
        %v740 = vld [vmem:[#allocation4 + $0x78] sm:$0xff]
        %v757 = vunpack.c.l.b16 %v725
        %v758 = vunpack.c.h.b16 %v725
        %v759 = vunpack.c.l.b16 %v726
        %v760 = vunpack.c.h.b16 %v726
        %v761 = vunpack.c.l.b16 %v727
        %v762 = vunpack.c.h.b16 %v727
        %v763 = vunpack.c.l.b16 %v728
        %v764 = vunpack.c.h.b16 %v728
        %v765 = vunpack.c.l.b16 %v729
        %v766 = vunpack.c.h.b16 %v729
        %v767 = vunpack.c.l.b16 %v730
        %v768 = vunpack.c.h.b16 %v730
        %v769 = vunpack.c.l.b16 %v731
        %v770 = vunpack.c.h.b16 %v731
        %v771 = vunpack.c.l.b16 %v732
        %v772 = vunpack.c.h.b16 %v732
        %v773 = vunpack.c.l.b16 %v733
        %v774 = vunpack.c.h.b16 %v733
        %v775 = vunpack.c.l.b16 %v734
        %v776 = vunpack.c.h.b16 %v734
        %v777 = vunpack.c.l.b16 %v735
        %v778 = vunpack.c.h.b16 %v735
        %v779 = vunpack.c.l.b16 %v736
        %v780 = vunpack.c.h.b16 %v736
        %v781 = vunpack.c.l.b16 %v737
        %v782 = vunpack.c.h.b16 %v737
        %v783 = vunpack.c.l.b16 %v738
        %v784 = vunpack.c.h.b16 %v738
        %v785 = vunpack.c.l.b16 %v739
        %v786 = vunpack.c.h.b16 %v739
        %v787 = vunpack.c.l.b16 %v740
        %v788 = vunpack.c.h.b16 %v740
        %v789 = vpack.c.b16 %v759, %v757
        %v790 = vpack.c.b16 %v760, %v758
        %v791 = vpack.c.b16 %v763, %v761
        %v792 = vpack.c.b16 %v764, %v762
        %v793 = vpack.c.b16 %v767, %v765
        %v794 = vpack.c.b16 %v768, %v766
        %v795 = vpack.c.b16 %v771, %v769
        %v796 = vpack.c.b16 %v772, %v770
        %v797 = vpack.c.b16 %v775, %v773
        %v798 = vpack.c.b16 %v776, %v774
        %v799 = vpack.c.b16 %v779, %v777
        %v800 = vpack.c.b16 %v780, %v778
        %v801 = vpack.c.b16 %v783, %v781
        %v802 = vpack.c.b16 %v784, %v782
        %v803 = vpack.c.b16 %v787, %v785
        %v804 = vpack.c.b16 %v788, %v786
        %821 = vmatpush.bf16.msra.mxu0 %v803
        %822 = vmatpush.bf16.msra.mxu0 %v801
        %823 = vmatpush.bf16.msra.mxu0 %v799
        %824 = vmatpush.bf16.msra.mxu0 %v797
        %825 = vmatpush.bf16.msra.mxu0 %v795
        %826 = vmatpush.bf16.msra.mxu0 %v793
        %827 = vmatpush.bf16.msra.mxu0 %v791
        %828 = vmatpush.bf16.msra.mxu0 %v789
        %829 = vmatmul.bf16.gmra.mxu0 %v724
        %v830 = vpop.f32.mrf.mxu0
        %v831 = vadd.f32 0.0, %v830
        %v832 = vpop.f32.mrf.mxu0
        %v833 = vadd.f32 0.0, %v832
        %834 = vdwg.mxu0
        %835 = vmatpush.bf16.msra.mxu0 %v804
        %836 = vmatpush.bf16.msra.mxu0 %v802
        %837 = vmatpush.bf16.msra.mxu0 %v800
        %838 = vmatpush.bf16.msra.mxu0 %v798
        %839 = vmatpush.bf16.msra.mxu0 %v796
        %840 = vmatpush.bf16.msra.mxu0 %v794
        %841 = vmatpush.bf16.msra.mxu0 %v792
        %842 = vmatpush.bf16.msra.mxu0 %v790
        %843 = vmatmul.bf16.gmra.mxu0 %v724
        %v844 = vpop.f32.mrf.mxu0
        %v845 = vadd.f32 0.0, %v844
        %v846 = vpop.f32.mrf.mxu0
        %v847 = vadd.f32 0.0, %v846
        %848 = vdwg.mxu0
        %v849 = vadd.f32 %v413, %v831
        %v850 = vadd.f32 %v414, %v845
        %v851 = vadd.f32 %v413, %v833
        %v852 = vadd.f32 %v414, %v847
        %v853 = vunpack.c.h.b16 %v402
        %v854 = vunpack.c.h.b16 %v403
        %v855 = vpack.c.b16 %v854, %v853
        %857 = vmatpush.bf16.msra.mxu0 %v478
        %858 = vmatpush.bf16.msra.mxu0 %v477
        %859 = vmatpush.bf16.msra.mxu0 %v476
        %860 = vmatpush.bf16.msra.mxu0 %v475
        %861 = vmatpush.bf16.msra.mxu0 %v474
        %862 = vmatpush.bf16.msra.mxu0 %v473
        %863 = vmatpush.bf16.msra.mxu0 %v472
        %864 = vmatpush.bf16.msra.mxu0 %v471
        %865 = vmatmul.bf16.gmra.mxu0 %v855
        %v866 = vpop.f32.mrf.mxu0
        %v867 = vadd.f32 0.0, %v866
        %v868 = vpop.f32.mrf.mxu0
        %v869 = vadd.f32 0.0, %v868
        %870 = vdwg.mxu0
        %v871 = vpack.c.bf16 %v869, %v867
        %v872 = vunpack.c.h.b16 %v404
        %v873 = vunpack.c.h.b16 %v405
        %v874 = vpack.c.b16 %v873, %v872
        %876 = vmatpush.bf16.msra.mxu0 %v586
        %877 = vmatpush.bf16.msra.mxu0 %v584
        %878 = vmatpush.bf16.msra.mxu0 %v582
        %879 = vmatpush.bf16.msra.mxu0 %v580
        %880 = vmatpush.bf16.msra.mxu0 %v578
        %881 = vmatpush.bf16.msra.mxu0 %v576
        %882 = vmatpush.bf16.msra.mxu0 %v574
        %883 = vmatpush.bf16.msra.mxu0 %v572
        %884 = vmatmul.bf16.gmra.mxu0 %v874
        %v885 = vpop.f32.mrf.mxu0
        %v886 = vadd.f32 0.0, %v885
        %v887 = vpop.f32.mrf.mxu0
        %v888 = vadd.f32 0.0, %v887
        %889 = vdwg.mxu0
        %890 = vmatpush.bf16.msra.mxu0 %v587
        %891 = vmatpush.bf16.msra.mxu0 %v585
        %892 = vmatpush.bf16.msra.mxu0 %v583
        %893 = vmatpush.bf16.msra.mxu0 %v581
        %894 = vmatpush.bf16.msra.mxu0 %v579
        %895 = vmatpush.bf16.msra.mxu0 %v577
        %896 = vmatpush.bf16.msra.mxu0 %v575
        %897 = vmatpush.bf16.msra.mxu0 %v573
        %898 = vmatmul.bf16.gmra.mxu0 %v874
        %v899 = vpop.f32.mrf.mxu0
        %v900 = vadd.f32 0.0, %v899
        %v901 = vpop.f32.mrf.mxu0
        %v902 = vadd.f32 0.0, %v901
        %903 = vdwg.mxu0
        %v904 = vpack.c.bf16 %v888, %v886
        %v905 = vpack.c.bf16 %v902, %v900
        %906 = vmatpush.bf16.xpose.msra.mxu0 0
        %907 = vmatpush.bf16.xpose.msra.mxu0 0
        %908 = vmatpush.bf16.xpose.msra.mxu0 0
        %909 = vmatpush.bf16.xpose.msra.mxu0 0
        %910 = vmatpush.bf16.xpose.msra.mxu0 0
        %911 = vmatpush.bf16.xpose.msra.mxu0 0
        %912 = vmatpush.bf16.xpose.msra.mxu0 0
        %913 = vmatpush.bf16.xpose.msra.mxu0 %v904
        %914 = vmatmul.bf16.gmra.mxu0 %v871
        %v915 = vpop.f32.mrf.mxu0
        %v916 = vadd.f32 0.0, %v915
        %v917 = vpop.f32.mrf.mxu0
        %v918 = vadd.f32 0.0, %v917
        %919 = vdwg.mxu0
        %v920 = vsel %vm410, %v916, -1e+20
        %v921 = vsel %vm410, %v918, -1e+20
        %v922 = vmul.f32 %v920, 0.0625
        %v923 = vmul.f32 %v921, 0.0625
        %v924 = vsel %vm652, %v922, -inf
        %925 = vmax.xlane.f32.xlu0 %v924
        %v926 = vpop.xlane.xlu0 %925
        %v927 = vsel %vm656, %v923, -inf
        %928 = vmax.xlane.f32.xlu0 %v927
        %v929 = vpop.xlane.xlu0 %928
        %v930 = vsub.f32 %v922, %v926
        %v931 = vsub.f32 %v923, %v929
        %v932 = vmul.f32 %v930, 1.442695
        %v933 = vpow.pop %v932
        %v934 = vmul.f32 %v931, 1.442695
        %v935 = vpow.pop %v934
        %v936 = vsel %vm652, %v933, 0.0
        %937 = vadd.xlane.f32.xlu0 %v936
        %v938 = vpop.xlane.xlu0 %937
        %v939 = vsel %vm656, %v935, 0.0
        %940 = vadd.xlane.f32.xlu0 %v939
        %v941 = vpop.xlane.xlu0 %940
        %v942 = vrcp.pop %v938
        %v943 = vmul.f32 %v938, %v942
        %v944 = vsub.f32 1.0, %v943
        %v945 = vmul.f32 %v942, %v944
        %v946 = vadd.f32 %v942, %v945
        %vm947 = vweird.f32 %v938
        %vm948 = vweird.f32 %v942
        %vm949 = vmor %vm947, %vm948
        %v950 = vsel %vm949, %v942, %v946
        %v951 = vand.u32 2147483647, %v938
        %vm952 = vcmp.eq.f32.partialorder %v951, 8.507059e+37
        %v953 = vand.u32 %v938, 2147483648
        %v954 = vor.u32 1.1754944e-38, %v953
        %v955 = vsel %vm952, %v954, %v950
        %v956 = vmul.f32 %v933, %v955
        %v957 = vrcp.pop %v941
        %v958 = vmul.f32 %v941, %v957
        %v959 = vsub.f32 1.0, %v958
        %v960 = vmul.f32 %v957, %v959
        %v961 = vadd.f32 %v957, %v960
        %vm962 = vweird.f32 %v941
        %vm963 = vweird.f32 %v957
        %vm964 = vmor %vm962, %vm963
        %v965 = vsel %vm964, %v957, %v961
        %v966 = vand.u32 2147483647, %v941
        %vm967 = vcmp.eq.f32.partialorder %v966, 8.507059e+37
        %v968 = vand.u32 %v941, 2147483648
        %v969 = vor.u32 1.1754944e-38, %v968
        %v970 = vsel %vm967, %v969, %v965
        %v971 = vmul.f32 %v935, %v970
        %v972 = vpack.c.bf16 %v971, %v956
        %v974 = vsel %vm652, %v972, 0
        %v977 = vsel %vm706, %v905, 0
        %979 = vmatpush.bf16.msra.mxu0 0
        %980 = vmatpush.bf16.msra.mxu0 0
        %981 = vmatpush.bf16.msra.mxu0 0
        %982 = vmatpush.bf16.msra.mxu0 0
        %983 = vmatpush.bf16.msra.mxu0 0
        %984 = vmatpush.bf16.msra.mxu0 0
        %985 = vmatpush.bf16.msra.mxu0 0
        %986 = vmatpush.bf16.msra.mxu0 %v977
        %987 = vmatmul.bf16.gmra.mxu0 %v974
        %v988 = vpop.f32.mrf.mxu0
        %v989 = vadd.f32 0.0, %v988
        %v990 = vpop.f32.mrf.mxu0
        %v991 = vadd.f32 0.0, %v990
        %992 = vdwg.mxu0
        %v993 = vpack.c.bf16 %v991, %v989
        %v994 = vld [vmem:[#allocation4 + $0x80] sm:$0xff]
        %v995 = vld [vmem:[#allocation4 + $0x88] sm:$0xff]
        %v996 = vld [vmem:[#allocation4 + $0x90] sm:$0xff]
        %v997 = vld [vmem:[#allocation4 + $0x98] sm:$0xff]
        %v998 = vld [vmem:[#allocation4 + $0xa0] sm:$0xff]
        %v999 = vld [vmem:[#allocation4 + $0xa8] sm:$0xff]
        %v1000 = vld [vmem:[#allocation4 + $0xb0] sm:$0xff]
        %v1001 = vld [vmem:[#allocation4 + $0xb8] sm:$0xff]
        %v1002 = vld [vmem:[#allocation4 + $0xc0] sm:$0xff]
        %v1003 = vld [vmem:[#allocation4 + $0xc8] sm:$0xff]
        %v1004 = vld [vmem:[#allocation4 + $0xd0] sm:$0xff]
        %v1005 = vld [vmem:[#allocation4 + $0xd8] sm:$0xff]
        %v1006 = vld [vmem:[#allocation4 + $0xe0] sm:$0xff]
        %v1007 = vld [vmem:[#allocation4 + $0xe8] sm:$0xff]
        %v1008 = vld [vmem:[#allocation4 + $0xf0] sm:$0xff]
        %v1009 = vld [vmem:[#allocation4 + $0xf8] sm:$0xff]
        %v1026 = vunpack.c.l.b16 %v994
        %v1027 = vunpack.c.h.b16 %v994
        %v1028 = vunpack.c.l.b16 %v995
        %v1029 = vunpack.c.h.b16 %v995
        %v1030 = vunpack.c.l.b16 %v996
        %v1031 = vunpack.c.h.b16 %v996
        %v1032 = vunpack.c.l.b16 %v997
        %v1033 = vunpack.c.h.b16 %v997
        %v1034 = vunpack.c.l.b16 %v998
        %v1035 = vunpack.c.h.b16 %v998
        %v1036 = vunpack.c.l.b16 %v999
        %v1037 = vunpack.c.h.b16 %v999
        %v1038 = vunpack.c.l.b16 %v1000
        %v1039 = vunpack.c.h.b16 %v1000
        %v1040 = vunpack.c.l.b16 %v1001
        %v1041 = vunpack.c.h.b16 %v1001
        %v1042 = vunpack.c.l.b16 %v1002
        %v1043 = vunpack.c.h.b16 %v1002
        %v1044 = vunpack.c.l.b16 %v1003
        %v1045 = vunpack.c.h.b16 %v1003
        %v1046 = vunpack.c.l.b16 %v1004
        %v1047 = vunpack.c.h.b16 %v1004
        %v1048 = vunpack.c.l.b16 %v1005
        %v1049 = vunpack.c.h.b16 %v1005
        %v1050 = vunpack.c.l.b16 %v1006
        %v1051 = vunpack.c.h.b16 %v1006
        %v1052 = vunpack.c.l.b16 %v1007
        %v1053 = vunpack.c.h.b16 %v1007
        %v1054 = vunpack.c.l.b16 %v1008
        %v1055 = vunpack.c.h.b16 %v1008
        %v1056 = vunpack.c.l.b16 %v1009
        %v1057 = vunpack.c.h.b16 %v1009
        %v1058 = vpack.c.b16 %v1028, %v1026
        %v1059 = vpack.c.b16 %v1029, %v1027
        %v1060 = vpack.c.b16 %v1032, %v1030
        %v1061 = vpack.c.b16 %v1033, %v1031
        %v1062 = vpack.c.b16 %v1036, %v1034
        %v1063 = vpack.c.b16 %v1037, %v1035
        %v1064 = vpack.c.b16 %v1040, %v1038
        %v1065 = vpack.c.b16 %v1041, %v1039
        %v1066 = vpack.c.b16 %v1044, %v1042
        %v1067 = vpack.c.b16 %v1045, %v1043
        %v1068 = vpack.c.b16 %v1048, %v1046
        %v1069 = vpack.c.b16 %v1049, %v1047
        %v1070 = vpack.c.b16 %v1052, %v1050
        %v1071 = vpack.c.b16 %v1053, %v1051
        %v1072 = vpack.c.b16 %v1056, %v1054
        %v1073 = vpack.c.b16 %v1057, %v1055
        %1090 = vmatpush.bf16.msra.mxu0 %v1072
        %1091 = vmatpush.bf16.msra.mxu0 %v1070
        %1092 = vmatpush.bf16.msra.mxu0 %v1068
        %1093 = vmatpush.bf16.msra.mxu0 %v1066
        %1094 = vmatpush.bf16.msra.mxu0 %v1064
        %1095 = vmatpush.bf16.msra.mxu0 %v1062
        %1096 = vmatpush.bf16.msra.mxu0 %v1060
        %1097 = vmatpush.bf16.msra.mxu0 %v1058
        %1098 = vmatmul.bf16.gmra.mxu0 %v993
        %v1099 = vpop.f32.mrf.mxu0
        %v1100 = vadd.f32 0.0, %v1099
        %v1101 = vpop.f32.mrf.mxu0
        %v1102 = vadd.f32 0.0, %v1101
        %1103 = vdwg.mxu0
        %1104 = vmatpush.bf16.msra.mxu0 %v1073
        %1105 = vmatpush.bf16.msra.mxu0 %v1071
        %1106 = vmatpush.bf16.msra.mxu0 %v1069
        %1107 = vmatpush.bf16.msra.mxu0 %v1067
        %1108 = vmatpush.bf16.msra.mxu0 %v1065
        %1109 = vmatpush.bf16.msra.mxu0 %v1063
        %1110 = vmatpush.bf16.msra.mxu0 %v1061
        %1111 = vmatpush.bf16.msra.mxu0 %v1059
        %1112 = vmatmul.bf16.gmra.mxu0 %v993
        %v1113 = vpop.f32.mrf.mxu0
        %v1114 = vadd.f32 0.0, %v1113
        %v1115 = vpop.f32.mrf.mxu0
        %v1116 = vadd.f32 0.0, %v1115
        %1117 = vdwg.mxu0
        %v1118 = vadd.f32 %v849, %v1100
        %v1119 = vadd.f32 %v850, %v1114
        %v1120 = vadd.f32 %v851, %v1102
        %v1121 = vadd.f32 %v852, %v1116
        %v1122 = vunpack.c.l.bf16 %v402
        %v1123 = vunpack.c.h.bf16 %v402
        %v1124 = vunpack.c.l.bf16 %v403
        %v1125 = vunpack.c.h.bf16 %v403
        %v1126 = vadd.f32 %v1118, %v1122
        %v1127 = vadd.f32 %v1119, %v1123
        %v1128 = vadd.f32 %v1120, %v1124
        %v1129 = vadd.f32 %v1121, %v1125
        %v1130 = vadd.f32 %v1126, %v1127
        %1131 = vadd.xlane.f32.xlu0 %v1130
        %v1132 = vpop.xlane.xlu0 %1131
        %vm1133 = vcmask 1043456
        %v1134 = vsel %vm1133, %v1128, 0.0
        %v1135 = vsel %vm1133, %v1129, 0.0
        %v1136 = vadd.f32 %v1134, %v1135
        %1137 = vadd.xlane.f32.xlu0 %v1136
        %v1138 = vpop.xlane.xlu0 %1137
        %v1139 = vrcp.pop 256.0
        %v1140 = vmul.f32 256.0, %v1139
        %v1141 = vsub.f32 1.0, %v1140
        %v1142 = vmul.f32 %v1139, %v1141
        %v1143 = vadd.f32 %v1139, %v1142
        %vm1144 = vweird.f32 %v1139
        %v1145 = vsel %vm1144, %v1139, %v1143
        %v1146 = vmul.f32 %v1132, %v1145
        %v1147 = vmul.f32 %v1138, %v1145
        %v1148 = vsub.f32 %v1126, %v1146
        %v1149 = vsub.f32 %v1127, %v1146
        %v1150 = vsub.f32 %v1128, %v1147
        %v1151 = vsub.f32 %v1129, %v1147
        %v1152 = vmul.f32 %v1148, %v1148
        %v1153 = vmul.f32 %v1149, %v1149
        %v1154 = vmul.f32 %v1150, %v1150
        %v1155 = vmul.f32 %v1151, %v1151
        %v1156 = vadd.f32 %v1152, %v1153
        %1157 = vadd.xlane.f32.xlu0 %v1156
        %v1158 = vpop.xlane.xlu0 %1157
        %v1159 = vsel %vm1133, %v1154, 0.0
        %v1160 = vsel %vm1133, %v1155, 0.0
        %v1161 = vadd.f32 %v1159, %v1160
        %1162 = vadd.xlane.f32.xlu0 %v1161
        %v1163 = vpop.xlane.xlu0 %1162
        %v1164 = vmul.f32 %v1158, %v1145
        %v1165 = vmul.f32 %v1163, %v1145
        %v1166 = vadd.f32 %v1164, 1e-05
        %v1167 = vadd.f32 %v1165, 1e-05
        %v1168 = vrsqrt.pop %v1166
        %v1169 = vmul.f32 %v1168, %v1166
        %v1170 = vmul.f32 %v1169, %v1168
        %v1171 = vmul.f32 0.5, %v1170
        %v1172 = vsub.f32 1.5, %v1171
        %v1173 = vmul.f32 %v1168, %v1172
        %vm1174 = vweird.f32 %v1166
        %vm1175 = vweird.f32 %v1168
        %vm1176 = vmor %vm1174, %vm1175
        %v1177 = vsel %vm1176, %v1168, %v1173
        %v1178 = vrsqrt.pop %v1167
        %v1179 = vmul.f32 %v1178, %v1167
        %v1180 = vmul.f32 %v1179, %v1178
        %v1181 = vmul.f32 0.5, %v1180
        %v1182 = vsub.f32 1.5, %v1181
        %v1183 = vmul.f32 %v1178, %v1182
        %vm1184 = vweird.f32 %v1167
        %vm1185 = vweird.f32 %v1178
        %vm1186 = vmor %vm1184, %vm1185
        %v1187 = vsel %vm1186, %v1178, %v1183
        %v1188 = vmul.f32 %v1148, %v1177
        %v1189 = vmul.f32 %v1149, %v1177
        %v1190 = vmul.f32 %v1150, %v1187
        %v1191 = vmul.f32 %v1151, %v1187
        %v1192 = vld [vmem:[%s7] sm:$0x3]
        %v1194 = vperm.slane %v1192, 0
        %v1195 = vperm.slane %v1192, 1
        %v1198 = vmul.f32 %v1188, %v1194
        %v1199 = vmul.f32 %v1189, %v1195
        %v1200 = vmul.f32 %v1190, %v1194
        %v1201 = vmul.f32 %v1191, %v1195
        %v1202 = vld [vmem:[%s8] sm:$0x3]
        %v1204 = vperm.slane %v1202, 0
        %v1205 = vperm.slane %v1202, 1
        %v1208 = vadd.f32 %v1198, %v1204
        %v1209 = vadd.f32 %v1199, %v1205
        %v1210 = vadd.f32 %v1200, %v1204
        %v1211 = vadd.f32 %v1201, %v1205
        %v1212 = vpack.c.bf16 %v1209, %v1208
        %v1213 = vpack.c.bf16 %v1211, %v1210
        %1214 = vst [vmem:[%s400] sm:$0xff] %v1212
        %1215 = vst [vmem:[%s400 + $0x8] sm:$0x33] %v1213
        %p1216 = scmp.lt.s32.totalorder %s22, 1
        %s1217 = scalar_select %p1216, %s22, 1
        %s1218 = smul.addr %s1217, 4
        %s1219 = smul.addr %s1218, 4
        %s1220 = scalar_lea.vmem %s9, %s1219
        // Predicated region
        $region65: #{tpu_custom_call.1} parent=55 // pred_check
          %p1221 = pneg %p244
        $region66: #{tpu_custom_call.1} parent=55 // pred_check_branch
          %1223 = sbr.rel (%p1221) target = $region68
        $region67: #{tpu_custom_call.1} parent=55 // pred_region
          _
        $region68: #{tpu_custom_call.1} parent=55 // pred_fallthru
          _
      $region56: #{tpu_custom_call.1} parent=5 // pred_fallthru
        _
      %p1224 = scmp.le.s32.totalorder 2, %s17
      // Predicated region
      $region69: #{tpu_custom_call.1} parent=5 // pred_check
        %p1225 = pneg %p1224
      $region70: #{tpu_custom_call.1} parent=5 // pred_check_branch
        %1227 = sbr.rel (%p1225) target = $region72
      $region71: #{tpu_custom_call.1} parent=5 // pred_region
        %s1228 = ssub.s32 %s17, 2
        // Predicated region
        $region73: #{tpu_custom_call.1} parent=71 // pred_check
          %p1229 = pneg %p250
        $region74: #{tpu_custom_call.1} parent=71 // pred_check_branch
          %1231 = sbr.rel (%p1229) target = $region76
        $region75: #{tpu_custom_call.1} parent=71 // pred_region
          %p1232 = scmp.lt.s32.totalorder %s23, 1
          %s1233 = scalar_select %p1232, %s23, 1
          %s1234 = smul.addr %s1233, 4
          %s1235 = smul.addr %s1234, 4
          %s1236 = scalar_lea.vmem %s9, %s1235
        $region76: #{tpu_custom_call.1} parent=71 // pred_fallthru
          _
      $region72: #{tpu_custom_call.1} parent=5 // pred_fallthru
        _
    $region6: #{tpu_custom_call.1} parent=1 // loop_footer
      %s21 = sadd.s32 1, %s17
    $region7: #{tpu_custom_call.1} parent=1 // loop_footer_branch
      %16 = sbr.rel target = $region3
    $region8: #{tpu_custom_call.1} parent=1 // loop_exit
      _
    %1237 = vsyncpa [#allocation3], 1
    %s1238 = scalar_lea.sflag [#allocation3], 1
    %1239 = vsyncpa %s1238, 1
    %1240 = vsyncpa [#allocation5], 1

</llo_original>
